<compile_context>
chip_gen: v6e
topology: v6e:2x2x1
jax: 0.10.0
libtpu: 0.0.40
codegen_flags: <defaults>
</compile_context>

<pallas_src>
import functools

import jax
import jax.numpy as jnp
from jax.experimental import pallas as pl
from jax.experimental.pallas import tpu as pltpu

K_IN = 28 * 28          # 784
H1, H2, H3 = 512, 256, 128
OUT = 10
OUT_PAD = 128           # lane-dense final layer; sliced back to 10 in the wrapper


def _mlp_kernel(x_ref, w1_ref, b1_ref, w2_ref, b2_ref, w3_ref, b3_ref,
                w4_ref, b4_ref, o_ref):
    """Fused forward: 784->512->256->128->128(pad 10).

    Matmuls run with bf16 operands on the MXU with f32 accumulation; bias-add
    and ReLU epilogues stay in f32. Dropout layers are eval-mode identity.
    """
    # TODO(synk): training-mode dropout (p=0.5 mask + 2x scale) not implemented;
    #             eval-mode forward (identity) is reproduced exactly.
    # In-kernel bf16 cast (rides on idle VPU/vld slots under the MXU) instead
    # of a wrapper-side pad+cast pass over HBM.
    x = x_ref[...].astype(jnp.bfloat16)                              # (tm, 784)

    h = jnp.dot(x, w1_ref[...], preferred_element_type=jnp.float32) + b1_ref[...]
    h = jnp.maximum(h, 0.0).astype(jnp.bfloat16)

    h = jnp.dot(h, w2_ref[...], preferred_element_type=jnp.float32) + b2_ref[...]
    h = jnp.maximum(h, 0.0).astype(jnp.bfloat16)

    h = jnp.dot(h, w3_ref[...], preferred_element_type=jnp.float32) + b3_ref[...]
    h = jnp.maximum(h, 0.0).astype(jnp.bfloat16)

    h = jnp.dot(h, w4_ref[...], preferred_element_type=jnp.float32) + b4_ref[...]
    o_ref[...] = h.astype(o_ref.dtype)


def prepare_params(params):
    """One-time conversion of f32 (in,out) params to kernel layout.

    Weights -> bf16 (MXU-peak dtype), w4/b4 zero-padded 10 -> 128 output lanes.
    Call once and reuse the result for every forward call — this avoids
    re-reading ~2.5 MiB of f32 weights through HBM on each call.
    """
    w1, b1, w2, b2, w3, b3, w4, b4 = params
    w1b = w1.astype(jnp.bfloat16)                                    # (784, 512)
    w2b = w2.astype(jnp.bfloat16)                                    # (512, 256)
    w3b = w3.astype(jnp.bfloat16)                                    # (256, 128)
    w4p = jnp.pad(w4, ((0, 0), (0, OUT_PAD - OUT))).astype(jnp.bfloat16)
    b4p = jnp.pad(b4, ((0, 0), (0, OUT_PAD - OUT))).astype(jnp.float32)
    return (w1b, b1.astype(jnp.float32), w2b, b2.astype(jnp.float32),
            w3b, b3.astype(jnp.float32), w4p, b4p)


def _round_up(n, m):
    return -(-n // m) * m


@functools.partial(jax.jit, static_argnames=("tm_target",))
def deep_nn_forward(x, prepared_params, *, tm_target=512):
    """x: (B, 1, 28, 28) or anything flattenable to (B, 784), float32.

    prepared_params: output of prepare_params().
    """
    w1, b1, w2, b2, w3, b3, w4, b4 = prepared_params
    xf = x.reshape(-1, K_IN)                       # == x.view(-1, 784)
    B = xf.shape[0]

    # Adaptive batch tile:
    #   * pad B only up to a bf16-sublane multiple (16) — not a fixed 256
    #   * small batches: one tile; medium (32..tm_target): split into 2 tiles
    #     so the "parallel" grid axis can shard across both v7x TensorCores
    #   * large batches: tm_target-row tiles (~85% of HBM roofline on v6e)
    Bp = _round_up(B, 16)
    if Bp <= tm_target:
        tm = Bp // 2 if Bp >= 32 else Bp
    else:
        tm = tm_target
        Bp = _round_up(B, tm)
    if Bp != B:
        xf = jnp.pad(xf, ((0, Bp - B), (0, 0)))    # batch-dim only; K stays 784

    grid = (Bp // tm,)

    def resident(shape):
        # Full-array block with a constant block index: stays resident in VMEM,
        # no re-DMA between grid steps.
        # TODO(synk): pipeline_mode=pl.Buffered(1) would drop the second weight
        #             buffer (~1.2 MiB VMEM); omitted to stay on the safe path.
        return pl.BlockSpec(shape, lambda *args, n=len(shape): (0,) * n)

    weight_elems = K_IN * H1 + H1 * H2 + H2 * H3 + H3 * OUT_PAD
    flops = 2 * Bp * weight_elems
    bytes_accessed = (
        Bp * K_IN * 4                              # x (f32, unpadded K)
        + weight_elems * 2                         # weights (bf16)
        + (H1 + H2 + H3 + OUT_PAD) * 4             # biases (f32)
        + Bp * OUT_PAD * 4                         # output (f32)
    )

    out = pl.pallas_call(
        _mlp_kernel,
        out_shape=jax.ShapeDtypeStruct((Bp, OUT_PAD), jnp.float32),
        grid_spec=pltpu.PrefetchScalarGridSpec(
            num_scalar_prefetch=0,
            grid=grid,
            in_specs=[
                pl.BlockSpec((tm, K_IN), lambda i: (i, 0)),   # x batch tile
                resident(w1.shape), resident(b1.shape),
                resident(w2.shape), resident(b2.shape),
                resident(w3.shape), resident(b3.shape),
                resident(w4.shape), resident(b4.shape),
            ],
            out_specs=pl.BlockSpec((tm, OUT_PAD), lambda i: (i, 0)),
        ),
        compiler_params=pltpu.CompilerParams(
            dimension_semantics=("parallel",),
            vmem_limit_bytes=48 * 1024 * 1024,     # headroom for tm up to 512+
        ),
        cost_estimate=pl.CostEstimate(
            flops=flops, transcendentals=0, bytes_accessed=bytes_accessed),
    )(xf, w1, b1, w2, b2, w3, b3, w4, b4)

    # Drop batch padding and the lane padding of the final layer.
    return out[:B, :OUT]


def init_params(key):
    """Deterministic init mimicking nn.Linear default (U[-1/sqrt(fan_in), +])."""
    dims = [(K_IN, H1), (H1, H2), (H2, H3), (H3, OUT)]
    params = []
    for fan_in, fan_out in dims:
        key, kw, kb = jax.random.split(key, 3)
        bound = 1.0 / jnp.sqrt(float(fan_in))
        # stored as (in, out) so the kernel does x @ W (== x @ W_torch.T)
        w = jax.random.uniform(kw, (fan_in, fan_out), jnp.float32, -bound, bound)
        b = jax.random.uniform(kb, (1, fan_out), jnp.float32, -bound, bound)
        params += [w, b]
    return tuple(params)


def _reference_forward(x, params):
    w1, b1, w2, b2, w3, b3, w4, b4 = params
    h = x.reshape(-1, K_IN)
    h = jnp.maximum(h @ w1 + b1, 0.0)
    h = jnp.maximum(h @ w2 + b2, 0.0)
    h = jnp.maximum(h @ w3 + b3, 0.0)
    return h @ w4 + b4


if __name__ == "__main__":
    key = jax.random.PRNGKey(0)
    kx, kp = jax.random.split(key)
    x = jax.random.normal(kx, (8, 1, 28, 28), jnp.float32)   # small NCHW batch
    params = init_params(kp)
    kernel_params = prepare_params(params)                   # one-time conversion

    out = deep_nn_forward(x, kernel_params)
    out = jax.block_until_ready(out)

    ref = _reference_forward(x, params)
    assert out.shape == (8, 10)
    # bf16 matmul operands (f32 accumulation) -> loosened tolerance vs f32 ref.
    assert jnp.allclose(out, ref, atol=5e-2, rtol=5e-2), "mismatch vs reference"

    print("KERNEL_OK")
</pallas_src>

<mosaic_0001>
module attributes {stable_mosaic.version = 11 : i64} {
  func.func @_mlp_kernel(%arg0: i32, %arg1: memref<16x784xf32, #tpu.memory_space<vmem>>, %arg2: memref<784x512xbf16, #tpu.memory_space<vmem>>, %arg3: memref<1x512xf32, #tpu.memory_space<vmem>>, %arg4: memref<512x256xbf16, #tpu.memory_space<vmem>>, %arg5: memref<1x256xf32, #tpu.memory_space<vmem>>, %arg6: memref<256x128xbf16, #tpu.memory_space<vmem>>, %arg7: memref<1x128xf32, #tpu.memory_space<vmem>>, %arg8: memref<128x128xbf16, #tpu.memory_space<vmem>>, %arg9: memref<1x128xf32, #tpu.memory_space<vmem>>, %arg10: memref<16x128xf32, #tpu.memory_space<vmem>>) attributes {dimension_semantics = [#tpu.dimension_semantics<parallel>], iteration_bounds = array<i64: 1>, scalar_prefetch = 0 : i64, scratch_operands = 0 : i64, tpu.core_type = #tpu.core_type<tc>, window_params = [{transform_indices = @transform_0, window_bounds = array<i64: 16, 784>}, {pipeline_mode = #tpu.pipeline_mode<synchronous>, transform_indices = @transform_1, window_bounds = array<i64: 784, 512>}, {pipeline_mode = #tpu.pipeline_mode<synchronous>, transform_indices = @transform_2, window_bounds = array<i64: 1, 512>}, {pipeline_mode = #tpu.pipeline_mode<synchronous>, transform_indices = @transform_3, window_bounds = array<i64: 512, 256>}, {pipeline_mode = #tpu.pipeline_mode<synchronous>, transform_indices = @transform_4, window_bounds = array<i64: 1, 256>}, {pipeline_mode = #tpu.pipeline_mode<synchronous>, transform_indices = @transform_5, window_bounds = array<i64: 256, 128>}, {pipeline_mode = #tpu.pipeline_mode<synchronous>, transform_indices = @transform_6, window_bounds = array<i64: 1, 128>}, {pipeline_mode = #tpu.pipeline_mode<synchronous>, transform_indices = @transform_7, window_bounds = array<i64: 128, 128>}, {pipeline_mode = #tpu.pipeline_mode<synchronous>, transform_indices = @transform_8, window_bounds = array<i64: 1, 128>}, {transform_indices = @transform_9, window_bounds = array<i64: 16, 128>}]} {
    %c0 = arith.constant 0 : index
    %c0_0 = arith.constant 0 : index
    %0 = vector.load %arg1[%c0, %c0_0] : memref<16x784xf32, #tpu.memory_space<vmem>>, vector<16x784xf32>
    %1 = arith.truncf %0 : vector<16x784xf32> to vector<16x784xbf16>
    %c0_1 = arith.constant 0 : index
    %c0_2 = arith.constant 0 : index
    %2 = vector.load %arg2[%c0_1, %c0_2] : memref<784x512xbf16, #tpu.memory_space<vmem>>, vector<784x512xbf16>
    %cst = arith.constant dense<0.000000e+00> : vector<16x512xf32>
    %3 = tpu.matmul %1, %2, %cst {dimension_numbers = #tpu.dot_dimension_numbers<[1], [0], [0], [1], [0, 0, 1, 1], [], []>} : vector<16x784xbf16>, vector<784x512xbf16>, vector<16x512xf32> -> vector<16x512xf32>
    %c0_3 = arith.constant 0 : index
    %c0_4 = arith.constant 0 : index
    %4 = vector.load %arg3[%c0_3, %c0_4] : memref<1x512xf32, #tpu.memory_space<vmem>>, vector<1x512xf32>
    %5 = vector.broadcast %4 : vector<1x512xf32> to vector<16x512xf32>
    %6 = arith.addf %3, %5 : vector<16x512xf32>
    %cst_5 = arith.constant 0.000000e+00 : f32
    %7 = vector.broadcast %cst_5 : f32 to vector<16x512xf32>
    %8 = arith.maximumf %6, %7 : vector<16x512xf32>
    %9 = arith.truncf %8 : vector<16x512xf32> to vector<16x512xbf16>
    %c0_6 = arith.constant 0 : index
    %c0_7 = arith.constant 0 : index
    %10 = vector.load %arg4[%c0_6, %c0_7] : memref<512x256xbf16, #tpu.memory_space<vmem>>, vector<512x256xbf16>
    %cst_8 = arith.constant dense<0.000000e+00> : vector<16x256xf32>
    %11 = tpu.matmul %9, %10, %cst_8 {dimension_numbers = #tpu.dot_dimension_numbers<[1], [0], [0], [1], [0, 0, 1, 1], [], []>} : vector<16x512xbf16>, vector<512x256xbf16>, vector<16x256xf32> -> vector<16x256xf32>
    %c0_9 = arith.constant 0 : index
    %c0_10 = arith.constant 0 : index
    %12 = vector.load %arg5[%c0_9, %c0_10] : memref<1x256xf32, #tpu.memory_space<vmem>>, vector<1x256xf32>
    %13 = vector.broadcast %12 : vector<1x256xf32> to vector<16x256xf32>
    %14 = arith.addf %11, %13 : vector<16x256xf32>
    %cst_11 = arith.constant 0.000000e+00 : f32
    %15 = vector.broadcast %cst_11 : f32 to vector<16x256xf32>
    %16 = arith.maximumf %14, %15 : vector<16x256xf32>
    %17 = arith.truncf %16 : vector<16x256xf32> to vector<16x256xbf16>
    %c0_12 = arith.constant 0 : index
    %c0_13 = arith.constant 0 : index
    %18 = vector.load %arg6[%c0_12, %c0_13] : memref<256x128xbf16, #tpu.memory_space<vmem>>, vector<256x128xbf16>
    %cst_14 = arith.constant dense<0.000000e+00> : vector<16x128xf32>
    %19 = tpu.matmul %17, %18, %cst_14 {dimension_numbers = #tpu.dot_dimension_numbers<[1], [0], [0], [1], [0, 0, 1, 1], [], []>} : vector<16x256xbf16>, vector<256x128xbf16>, vector<16x128xf32> -> vector<16x128xf32>
    %c0_15 = arith.constant 0 : index
    %c0_16 = arith.constant 0 : index
    %20 = vector.load %arg7[%c0_15, %c0_16] : memref<1x128xf32, #tpu.memory_space<vmem>>, vector<1x128xf32>
    %21 = vector.broadcast %20 : vector<1x128xf32> to vector<16x128xf32>
    %22 = arith.addf %19, %21 : vector<16x128xf32>
    %cst_17 = arith.constant 0.000000e+00 : f32
    %23 = vector.broadcast %cst_17 : f32 to vector<16x128xf32>
    %24 = arith.maximumf %22, %23 : vector<16x128xf32>
    %25 = arith.truncf %24 : vector<16x128xf32> to vector<16x128xbf16>
    %c0_18 = arith.constant 0 : index
    %c0_19 = arith.constant 0 : index
    %26 = vector.load %arg8[%c0_18, %c0_19] : memref<128x128xbf16, #tpu.memory_space<vmem>>, vector<128x128xbf16>
    %cst_20 = arith.constant dense<0.000000e+00> : vector<16x128xf32>
    %27 = tpu.matmul %25, %26, %cst_20 {dimension_numbers = #tpu.dot_dimension_numbers<[1], [0], [0], [1], [0, 0, 1, 1], [], []>} : vector<16x128xbf16>, vector<128x128xbf16>, vector<16x128xf32> -> vector<16x128xf32>
    %c0_21 = arith.constant 0 : index
    %c0_22 = arith.constant 0 : index
    %28 = vector.load %arg9[%c0_21, %c0_22] : memref<1x128xf32, #tpu.memory_space<vmem>>, vector<1x128xf32>
    %29 = vector.broadcast %28 : vector<1x128xf32> to vector<16x128xf32>
    %30 = arith.addf %27, %29 : vector<16x128xf32>
    %c0_23 = arith.constant 0 : index
    %c0_24 = arith.constant 0 : index
    %31 = vector.load %arg10[%c0_23, %c0_24] : memref<16x128xf32, #tpu.memory_space<vmem>>, vector<16x128xf32>
    tpu.vector_store %arg10[%c0_23, %c0_24], %30 {strides = array<i32>} : memref<16x128xf32, #tpu.memory_space<vmem>>, vector<16x128xf32>,
    return
  }
  func.func @transform_0(%arg0: i32) -> (i32, i32) {
    %c0_i32 = arith.constant 0 : i32
    %c0_i32_0 = arith.constant 0 : i32
    return %arg0, %c0_i32 : i32, i32
  }
  func.func @transform_1(%arg0: i32) -> (i32, i32) {
    %c0_i32 = arith.constant 0 : i32
    %c0_i32_0 = arith.constant 0 : i32
    %c0_i32_1 = arith.constant 0 : i32
    return %c0_i32, %c0_i32_0 : i32, i32
  }
  func.func @transform_2(%arg0: i32) -> (i32, i32) {
    %c0_i32 = arith.constant 0 : i32
    %c0_i32_0 = arith.constant 0 : i32
    %c0_i32_1 = arith.constant 0 : i32
    return %c0_i32, %c0_i32_0 : i32, i32
  }
  func.func @transform_3(%arg0: i32) -> (i32, i32) {
    %c0_i32 = arith.constant 0 : i32
    %c0_i32_0 = arith.constant 0 : i32
    %c0_i32_1 = arith.constant 0 : i32
    return %c0_i32, %c0_i32_0 : i32, i32
  }
  func.func @transform_4(%arg0: i32) -> (i32, i32) {
    %c0_i32 = arith.constant 0 : i32
    %c0_i32_0 = arith.constant 0 : i32
    %c0_i32_1 = arith.constant 0 : i32
    return %c0_i32, %c0_i32_0 : i32, i32
  }
  func.func @transform_5(%arg0: i32) -> (i32, i32) {
    %c0_i32 = arith.constant 0 : i32
    %c0_i32_0 = arith.constant 0 : i32
    %c0_i32_1 = arith.constant 0 : i32
    return %c0_i32, %c0_i32_0 : i32, i32
  }
  func.func @transform_6(%arg0: i32) -> (i32, i32) {
    %c0_i32 = arith.constant 0 : i32
    %c0_i32_0 = arith.constant 0 : i32
    %c0_i32_1 = arith.constant 0 : i32
    return %c0_i32, %c0_i32_0 : i32, i32
  }
  func.func @transform_7(%arg0: i32) -> (i32, i32) {
    %c0_i32 = arith.constant 0 : i32
    %c0_i32_0 = arith.constant 0 : i32
    %c0_i32_1 = arith.constant 0 : i32
    return %c0_i32, %c0_i32_0 : i32, i32
  }
  func.func @transform_8(%arg0: i32) -> (i32, i32) {
    %c0_i32 = arith.constant 0 : i32
    %c0_i32_0 = arith.constant 0 : i32
    %c0_i32_1 = arith.constant 0 : i32
    return %c0_i32, %c0_i32_0 : i32, i32
  }
  func.func @transform_9(%arg0: i32) -> (i32, i32) {
    %c0_i32 = arith.constant 0 : i32
    %c0_i32_0 = arith.constant 0 : i32
    return %arg0, %c0_i32 : i32, i32
  }
}

</mosaic_0001>

<llo_original>
// kernel: deep_nn_forward.1
$region0: #{deep_nn_forward.1}
  #allocation0 [shape = 'u32[]', space=smem, size = 0x4, offset = 0x4, fixed_abs, tag = 'smem constant byte address 0x4 - core index']
  #allocation1 [shape = 'u32[144,128]{1,0:T(1,128)}', space=vmem, size = 0x12000, scoped, tag = 'internal scratch']
  %s0 = inlined_call_operand.vmem [shape: f32[16,784], index: 0, kind: input, shape index: {}]
  %s1 = inlined_call_operand.hbm [shape: bf16[784,512], index: 1, kind: input, shape index: {}]
  %s2 = inlined_call_operand.vmem [shape: f32[1,512], index: 2, kind: input, shape index: {}]
  %s3 = inlined_call_operand.vmem [shape: bf16[512,256], index: 3, kind: input, shape index: {}]
  %s4 = inlined_call_operand.vmem [shape: f32[1,256], index: 4, kind: input, shape index: {}]
  %s5 = inlined_call_operand.vmem [shape: bf16[256,128], index: 5, kind: input, shape index: {}]
  %s6 = inlined_call_operand.vmem [shape: f32[1,128], index: 6, kind: input, shape index: {}]
  %s7 = inlined_call_operand.vmem [shape: bf16[128,128], index: 7, kind: input, shape index: {}]
  %s8 = inlined_call_operand.vmem [shape: f32[1,128], index: 8, kind: input, shape index: {}]
  %s9 = inlined_call_operand.vmem [shape: f32[16,128], index: 9, kind: output, shape index: {}]
  %s10 = sld [smem:[#allocation0]]
  $region50: #{deep_nn_forward.1} parent=0
    _
  %s12 = ssub.s32 1, %s10
  %s13 = scalar_select 0, %s12, %s10
  $region1: #{deep_nn_forward.1} parent=0
    #allocation2 [shape = 'u8[802816]{0}', space=vmem, size = 0xc4000, scoped, tag = 'input window, operand 1, single buffered']
    #allocation3 [shape = 's32[1]{0}', space=sflag, size = 0x4, scoped, tag = 'scoped memory for deep_nn_forward.1']
    %14 = vsyncpa [#allocation3], 0
    // Predicated region
    $region2: #{deep_nn_forward.1} parent=1 // pred_check
      _
    $region3: #{deep_nn_forward.1} parent=1 // pred_check_branch
      %16 = sbr.rel (0) target = $region5
    $region4: #{deep_nn_forward.1} parent=1 // pred_region
      _
    $region5: #{deep_nn_forward.1} parent=1 // pred_fallthru
      _
    // Predicated region
    $region6: #{deep_nn_forward.1} parent=1 // pred_check
      _
    $region7: #{deep_nn_forward.1} parent=1 // pred_check_branch
      %18 = sbr.rel (0) target = $region9
    $region8: #{deep_nn_forward.1} parent=1 // pred_region
      %s20 = ssub.s32 25088, 25088
      %21 = vsyncadd [#allocation3], %s20
      %s22 = sshll.u32 [#allocation2], 4
      %s23 = int_to_ptr.vmem [resolvable:$true] %s22
      %28 = dma.hbm_to_vmem [thread:$0]  %s1, 25088, %s23, [#allocation3], 256, 256, 16
    $region9: #{deep_nn_forward.1} parent=1 // pred_fallthru
      _
    // Predicated region
    $region10: #{deep_nn_forward.1} parent=1 // pred_check
      _
    $region11: #{deep_nn_forward.1} parent=1 // pred_check_branch
      %30 = sbr.rel (0) target = $region13
    $region12: #{deep_nn_forward.1} parent=1 // pred_region
      _
    $region13: #{deep_nn_forward.1} parent=1 // pred_fallthru
      _
    // Predicated region
    $region14: #{deep_nn_forward.1} parent=1 // pred_check
      _
    $region15: #{deep_nn_forward.1} parent=1 // pred_check_branch
      %32 = sbr.rel (0) target = $region17
    $region16: #{deep_nn_forward.1} parent=1 // pred_region
      _
    $region17: #{deep_nn_forward.1} parent=1 // pred_fallthru
      _
    // Predicated region
    $region18: #{deep_nn_forward.1} parent=1 // pred_check
      _
    $region19: #{deep_nn_forward.1} parent=1 // pred_check_branch
      %34 = sbr.rel (0) target = $region21
    $region20: #{deep_nn_forward.1} parent=1 // pred_region
      _
    $region21: #{deep_nn_forward.1} parent=1 // pred_fallthru
      _
    // Predicated region
    $region22: #{deep_nn_forward.1} parent=1 // pred_check
      _
    $region23: #{deep_nn_forward.1} parent=1 // pred_check_branch
      %36 = sbr.rel (0) target = $region25
    $region24: #{deep_nn_forward.1} parent=1 // pred_region
      _
    $region25: #{deep_nn_forward.1} parent=1 // pred_fallthru
      _
    // Predicated region
    $region26: #{deep_nn_forward.1} parent=1 // pred_check
      _
    $region27: #{deep_nn_forward.1} parent=1 // pred_check_branch
      %38 = sbr.rel (0) target = $region29
    $region28: #{deep_nn_forward.1} parent=1 // pred_region
      _
    $region29: #{deep_nn_forward.1} parent=1 // pred_fallthru
      _
    // Predicated region
    $region30: #{deep_nn_forward.1} parent=1 // pred_check
      _
    $region31: #{deep_nn_forward.1} parent=1 // pred_check_branch
      %40 = sbr.rel (0) target = $region33
    $region32: #{deep_nn_forward.1} parent=1 // pred_region
      _
    $region33: #{deep_nn_forward.1} parent=1 // pred_fallthru
      _
    // Predicated region
    $region34: #{deep_nn_forward.1} parent=1 // pred_check
      _
    $region35: #{deep_nn_forward.1} parent=1 // pred_check_branch
      %42 = sbr.rel (0) target = $region37
    $region36: #{deep_nn_forward.1} parent=1 // pred_region
      _
    $region37: #{deep_nn_forward.1} parent=1 // pred_fallthru
      _
    // Predicated region
    $region38: #{deep_nn_forward.1} parent=1 // pred_check
      _
    $region39: #{deep_nn_forward.1} parent=1 // pred_check_branch
      %44 = sbr.rel (0) target = $region41
    $region40: #{deep_nn_forward.1} parent=1 // pred_region
      %45 = dma.done [#allocation3], 25088
    $region41: #{deep_nn_forward.1} parent=1 // pred_fallthru
      _
    %v47 = vld [vmem:[%s0] sm:$0xff]
    %v48 = vld [vmem:[%s0 + $0x8] sm:$0xff]
    %v49 = vld [vmem:[%s0 + $0x10] sm:$0xff]
    %v50 = vld [vmem:[%s0 + $0x18] sm:$0xff]
    %v51 = vld [vmem:[%s0 + $0x20] sm:$0xff]
    %v52 = vld [vmem:[%s0 + $0x28] sm:$0xff]
    %v53 = vld [vmem:[%s0 + $0x30] sm:$0xff]
    %v54 = vld [vmem:[%s0 + $0x38] sm:$0xff]
    %v55 = vld [vmem:[%s0 + $0x40] sm:$0xff]
    %v56 = vld [vmem:[%s0 + $0x48] sm:$0xff]
    %v57 = vld [vmem:[%s0 + $0x50] sm:$0xff]
    %v58 = vld [vmem:[%s0 + $0x58] sm:$0xff]
    %v59 = vld [vmem:[%s0 + $0x60] sm:$0xff]
    %v60 = vld [vmem:[%s0 + $0x68] sm:$0xff]
    %v61 = vpack.c.bf16 %v54, %v47
    %v62 = vpack.c.bf16 %v55, %v48
    %v63 = vpack.c.bf16 %v56, %v49
    %v64 = vpack.c.bf16 %v57, %v50
    %v65 = vpack.c.bf16 %v58, %v51
    %v66 = vpack.c.bf16 %v59, %v52
    %v67 = vpack.c.bf16 %v60, %v53
    %v68 = vld [vmem:[#allocation2] sm:$0xff]
    %v69 = vld [vmem:[#allocation2 + $0x8] sm:$0xff]
    %v70 = vld [vmem:[#allocation2 + $0x10] sm:$0xff]
    %v71 = vld [vmem:[#allocation2 + $0x18] sm:$0xff]
    %v72 = vld [vmem:[#allocation2 + $0x20] sm:$0xff]
    %v73 = vld [vmem:[#allocation2 + $0x28] sm:$0xff]
    %v74 = vld [vmem:[#allocation2 + $0x30] sm:$0xff]
    %v75 = vld [vmem:[#allocation2 + $0x38] sm:$0xff]
    %v76 = vld [vmem:[#allocation2 + $0x40] sm:$0xff]
    %v77 = vld [vmem:[#allocation2 + $0x48] sm:$0xff]
    %v78 = vld [vmem:[#allocation2 + $0x50] sm:$0xff]
    %v79 = vld [vmem:[#allocation2 + $0x58] sm:$0xff]
    %v80 = vld [vmem:[#allocation2 + $0x60] sm:$0xff]
    %v81 = vld [vmem:[#allocation2 + $0x68] sm:$0xff]
    %v82 = vld [vmem:[#allocation2 + $0x70] sm:$0xff]
    %v83 = vld [vmem:[#allocation2 + $0x78] sm:$0xff]
    %v84 = vld [vmem:[#allocation2 + $0x80] sm:$0xff]
    %v85 = vld [vmem:[#allocation2 + $0x88] sm:$0xff]
    %v86 = vld [vmem:[#allocation2 + $0x90] sm:$0xff]
    %v87 = vld [vmem:[#allocation2 + $0x98] sm:$0xff]
    %v88 = vld [vmem:[#allocation2 + $0xa0] sm:$0xff]
    %v89 = vld [vmem:[#allocation2 + $0xa8] sm:$0xff]
    %v90 = vld [vmem:[#allocation2 + $0xb0] sm:$0xff]
    %v91 = vld [vmem:[#allocation2 + $0xb8] sm:$0xff]
    %v92 = vld [vmem:[#allocation2 + $0xc0] sm:$0xff]
    %v93 = vld [vmem:[#allocation2 + $0xc8] sm:$0xff]
    %v94 = vld [vmem:[#allocation2 + $0xd0] sm:$0xff]
    %v95 = vld [vmem:[#allocation2 + $0xd8] sm:$0xff]
    %v96 = vld [vmem:[#allocation2 + $0xe0] sm:$0xff]
    %v97 = vld [vmem:[#allocation2 + $0xe8] sm:$0xff]
    %v98 = vld [vmem:[#allocation2 + $0xf0] sm:$0xff]
    %v99 = vld [vmem:[#allocation2 + $0xf8] sm:$0xff]
    %v100 = vld [vmem:[#allocation2 + $0x100] sm:$0xff]
    %v101 = vld [vmem:[#allocation2 + $0x108] sm:$0xff]
    %v102 = vld [vmem:[#allocation2 + $0x110] sm:$0xff]
    %v103 = vld [vmem:[#allocation2 + $0x118] sm:$0xff]
    %v104 = vld [vmem:[#allocation2 + $0x120] sm:$0xff]
    %v105 = vld [vmem:[#allocation2 + $0x128] sm:$0xff]
    %v106 = vld [vmem:[#allocation2 + $0x130] sm:$0xff]
    %v107 = vld [vmem:[#allocation2 + $0x138] sm:$0xff]
    %v108 = vld [vmem:[#allocation2 + $0x140] sm:$0xff]
    %v109 = vld [vmem:[#allocation2 + $0x148] sm:$0xff]
    %v110 = vld [vmem:[#allocation2 + $0x150] sm:$0xff]
    %v111 = vld [vmem:[#allocation2 + $0x158] sm:$0xff]
    %v112 = vld [vmem:[#allocation2 + $0x160] sm:$0xff]
    %v113 = vld [vmem:[#allocation2 + $0x168] sm:$0xff]
    %v114 = vld [vmem:[#allocation2 + $0x170] sm:$0xff]
    %v115 = vld [vmem:[#allocation2 + $0x178] sm:$0xff]
    %v116 = vld [vmem:[#allocation2 + $0x180] sm:$0xff]
    %v117 = vld [vmem:[#allocation2 + $0x188] sm:$0xff]
    %v118 = vld [vmem:[#allocation2 + $0x190] sm:$0xff]
    %v119 = vld [vmem:[#allocation2 + $0x198] sm:$0xff]
    %v120 = vld [vmem:[#allocation2 + $0x1a0] sm:$0xff]
    %v121 = vld [vmem:[#allocation2 + $0x1a8] sm:$0xff]
    %v122 = vld [vmem:[#allocation2 + $0x1b0] sm:$0xff]
    %v123 = vld [vmem:[#allocation2 + $0x1b8] sm:$0xff]
    %v124 = vld [vmem:[#allocation2 + $0x1c0] sm:$0xff]
    %v125 = vld [vmem:[#allocation2 + $0x1c8] sm:$0xff]
    %v126 = vld [vmem:[#allocation2 + $0x1d0] sm:$0xff]
    %v127 = vld [vmem:[#allocation2 + $0x1d8] sm:$0xff]
    %v128 = vld [vmem:[#allocation2 + $0x1e0] sm:$0xff]
    %v129 = vld [vmem:[#allocation2 + $0x1e8] sm:$0xff]
    %v130 = vld [vmem:[#allocation2 + $0x1f0] sm:$0xff]
    %v131 = vld [vmem:[#allocation2 + $0x1f8] sm:$0xff]
    %v132 = vld [vmem:[#allocation2 + $0x200] sm:$0xff]
    %v133 = vld [vmem:[#allocation2 + $0x208] sm:$0xff]
    %v134 = vld [vmem:[#allocation2 + $0x210] sm:$0xff]
    %v135 = vld [vmem:[#allocation2 + $0x218] sm:$0xff]
    %v136 = vld [vmem:[#allocation2 + $0x220] sm:$0xff]
    %v137 = vld [vmem:[#allocation2 + $0x228] sm:$0xff]
    %v138 = vld [vmem:[#allocation2 + $0x230] sm:$0xff]
    %v139 = vld [vmem:[#allocation2 + $0x238] sm:$0xff]
    %v140 = vld [vmem:[#allocation2 + $0x240] sm:$0xff]
    %v141 = vld [vmem:[#allocation2 + $0x248] sm:$0xff]
    %v142 = vld [vmem:[#allocation2 + $0x250] sm:$0xff]
    %v143 = vld [vmem:[#allocation2 + $0x258] sm:$0xff]
    %v144 = vld [vmem:[#allocation2 + $0x260] sm:$0xff]
    %v145 = vld [vmem:[#allocation2 + $0x268] sm:$0xff]
    %v146 = vld [vmem:[#allocation2 + $0x270] sm:$0xff]
    %v147 = vld [vmem:[#allocation2 + $0x278] sm:$0xff]
    %v148 = vld [vmem:[#allocation2 + $0x280] sm:$0xff]
    %v149 = vld [vmem:[#allocation2 + $0x288] sm:$0xff]
    %v150 = vld [vmem:[#allocation2 + $0x290] sm:$0xff]
    %v151 = vld [vmem:[#allocation2 + $0x298] sm:$0xff]
    %v152 = vld [vmem:[#allocation2 + $0x2a0] sm:$0xff]
    %v153 = vld [vmem:[#allocation2 + $0x2a8] sm:$0xff]
    %v154 = vld [vmem:[#allocation2 + $0x2b0] sm:$0xff]
    %v155 = vld [vmem:[#allocation2 + $0x2b8] sm:$0xff]
    %v156 = vld [vmem:[#allocation2 + $0x2c0] sm:$0xff]
    %v157 = vld [vmem:[#allocation2 + $0x2c8] sm:$0xff]
    %v158 = vld [vmem:[#allocation2 + $0x2d0] sm:$0xff]
    %v159 = vld [vmem:[#allocation2 + $0x2d8] sm:$0xff]
    %v160 = vld [vmem:[#allocation2 + $0x2e0] sm:$0xff]
    %v161 = vld [vmem:[#allocation2 + $0x2e8] sm:$0xff]
    %v162 = vld [vmem:[#allocation2 + $0x2f0] sm:$0xff]
    %v163 = vld [vmem:[#allocation2 + $0x2f8] sm:$0xff]
    %v164 = vld [vmem:[#allocation2 + $0x300] sm:$0xff]
    %v165 = vld [vmem:[#allocation2 + $0x308] sm:$0xff]
    %v166 = vld [vmem:[#allocation2 + $0x310] sm:$0xff]
    %v167 = vld [vmem:[#allocation2 + $0x318] sm:$0xff]
    %v168 = vld [vmem:[#allocation2 + $0x320] sm:$0xff]
    %v169 = vld [vmem:[#allocation2 + $0x328] sm:$0xff]
    %v170 = vld [vmem:[#allocation2 + $0x330] sm:$0xff]
    %v171 = vld [vmem:[#allocation2 + $0x338] sm:$0xff]
    %v172 = vld [vmem:[#allocation2 + $0x340] sm:$0xff]
    %v173 = vld [vmem:[#allocation2 + $0x348] sm:$0xff]
    %v174 = vld [vmem:[#allocation2 + $0x350] sm:$0xff]
    %v175 = vld [vmem:[#allocation2 + $0x358] sm:$0xff]
    %v176 = vld [vmem:[#allocation2 + $0x360] sm:$0xff]
    %v177 = vld [vmem:[#allocation2 + $0x368] sm:$0xff]
    %v178 = vld [vmem:[#allocation2 + $0x370] sm:$0xff]
    %v179 = vld [vmem:[#allocation2 + $0x378] sm:$0xff]
    %v180 = vld [vmem:[#allocation2 + $0x380] sm:$0xff]
    %v181 = vld [vmem:[#allocation2 + $0x388] sm:$0xff]
    %v182 = vld [vmem:[#allocation2 + $0x390] sm:$0xff]
    %v183 = vld [vmem:[#allocation2 + $0x398] sm:$0xff]
    %v184 = vld [vmem:[#allocation2 + $0x3a0] sm:$0xff]
    %v185 = vld [vmem:[#allocation2 + $0x3a8] sm:$0xff]
    %v186 = vld [vmem:[#allocation2 + $0x3b0] sm:$0xff]
    %v187 = vld [vmem:[#allocation2 + $0x3b8] sm:$0xff]
    %v188 = vld [vmem:[#allocation2 + $0x3c0] sm:$0xff]
    %v189 = vld [vmem:[#allocation2 + $0x3c8] sm:$0xff]
    %v190 = vld [vmem:[#allocation2 + $0x3d0] sm:$0xff]
    %v191 = vld [vmem:[#allocation2 + $0x3d8] sm:$0xff]
    %v192 = vld [vmem:[#allocation2 + $0x3e0] sm:$0xff]
    %v193 = vld [vmem:[#allocation2 + $0x3e8] sm:$0xff]
    %v194 = vld [vmem:[#allocation2 + $0x3f0] sm:$0xff]
    %v195 = vld [vmem:[#allocation2 + $0x3f8] sm:$0xff]
    %v196 = vld [vmem:[#allocation2 + $0x400] sm:$0xff]
    %v197 = vld [vmem:[#allocation2 + $0x408] sm:$0xff]
    %v198 = vld [vmem:[#allocation2 + $0x410] sm:$0xff]
    %v199 = vld [vmem:[#allocation2 + $0x418] sm:$0xff]
    %v200 = vld [vmem:[#allocation2 + $0x420] sm:$0xff]
    %v201 = vld [vmem:[#allocation2 + $0x428] sm:$0xff]
    %v202 = vld [vmem:[#allocation2 + $0x430] sm:$0xff]
    %v203 = vld [vmem:[#allocation2 + $0x438] sm:$0xff]
    %v204 = vld [vmem:[#allocation2 + $0x440] sm:$0xff]
    %v205 = vld [vmem:[#allocation2 + $0x448] sm:$0xff]
    %v206 = vld [vmem:[#allocation2 + $0x450] sm:$0xff]
    %v207 = vld [vmem:[#allocation2 + $0x458] sm:$0xff]
    %v208 = vld [vmem:[#allocation2 + $0x460] sm:$0xff]
    %v209 = vld [vmem:[#allocation2 + $0x468] sm:$0xff]
    %v210 = vld [vmem:[#allocation2 + $0x470] sm:$0xff]
    %v211 = vld [vmem:[#allocation2 + $0x478] sm:$0xff]
    %v212 = vld [vmem:[#allocation2 + $0x480] sm:$0xff]
    %v213 = vld [vmem:[#allocation2 + $0x488] sm:$0xff]
    %v214 = vld [vmem:[#allocation2 + $0x490] sm:$0xff]
    %v215 = vld [vmem:[#allocation2 + $0x498] sm:$0xff]
    %v216 = vld [vmem:[#allocation2 + $0x4a0] sm:$0xff]
    %v217 = vld [vmem:[#allocation2 + $0x4a8] sm:$0xff]
    %v218 = vld [vmem:[#allocation2 + $0x4b0] sm:$0xff]
    %v219 = vld [vmem:[#allocation2 + $0x4b8] sm:$0xff]
    %v220 = vld [vmem:[#allocation2 + $0x4c0] sm:$0xff]
    %v221 = vld [vmem:[#allocation2 + $0x4c8] sm:$0xff]
    %v222 = vld [vmem:[#allocation2 + $0x4d0] sm:$0xff]
    %v223 = vld [vmem:[#allocation2 + $0x4d8] sm:$0xff]
    %v224 = vld [vmem:[#allocation2 + $0x4e0] sm:$0xff]
    %v225 = vld [vmem:[#allocation2 + $0x4e8] sm:$0xff]
    %v226 = vld [vmem:[#allocation2 + $0x4f0] sm:$0xff]
    %v227 = vld [vmem:[#allocation2 + $0x4f8] sm:$0xff]
    %v228 = vld [vmem:[#allocation2 + $0x500] sm:$0xff]
    %v229 = vld [vmem:[#allocation2 + $0x508] sm:$0xff]
    %v230 = vld [vmem:[#allocation2 + $0x510] sm:$0xff]
    %v231 = vld [vmem:[#allocation2 + $0x518] sm:$0xff]
    %v232 = vld [vmem:[#allocation2 + $0x520] sm:$0xff]
    %v233 = vld [vmem:[#allocation2 + $0x528] sm:$0xff]
    %v234 = vld [vmem:[#allocation2 + $0x530] sm:$0xff]
    %v235 = vld [vmem:[#allocation2 + $0x538] sm:$0xff]
    %v236 = vld [vmem:[#allocation2 + $0x540] sm:$0xff]
    %v237 = vld [vmem:[#allocation2 + $0x548] sm:$0xff]
    %v238 = vld [vmem:[#allocation2 + $0x550] sm:$0xff]
    %v239 = vld [vmem:[#allocation2 + $0x558] sm:$0xff]
    %v240 = vld [vmem:[#allocation2 + $0x560] sm:$0xff]
    %v241 = vld [vmem:[#allocation2 + $0x568] sm:$0xff]
    %v242 = vld [vmem:[#allocation2 + $0x570] sm:$0xff]
    %v243 = vld [vmem:[#allocation2 + $0x578] sm:$0xff]
    %v244 = vld [vmem:[#allocation2 + $0x580] sm:$0xff]
    %v245 = vld [vmem:[#allocation2 + $0x588] sm:$0xff]
    %v246 = vld [vmem:[#allocation2 + $0x590] sm:$0xff]
    %v247 = vld [vmem:[#allocation2 + $0x598] sm:$0xff]
    %v248 = vld [vmem:[#allocation2 + $0x5a0] sm:$0xff]
    %v249 = vld [vmem:[#allocation2 + $0x5a8] sm:$0xff]
    %v250 = vld [vmem:[#allocation2 + $0x5b0] sm:$0xff]
    %v251 = vld [vmem:[#allocation2 + $0x5b8] sm:$0xff]
    %v252 = vld [vmem:[#allocation2 + $0x5c0] sm:$0xff]
    %v253 = vld [vmem:[#allocation2 + $0x5c8] sm:$0xff]
    %v254 = vld [vmem:[#allocation2 + $0x5d0] sm:$0xff]
    %v255 = vld [vmem:[#allocation2 + $0x5d8] sm:$0xff]
    %v256 = vld [vmem:[#allocation2 + $0x5e0] sm:$0xff]
    %v257 = vld [vmem:[#allocation2 + $0x5e8] sm:$0xff]
    %v258 = vld [vmem:[#allocation2 + $0x5f0] sm:$0xff]
    %v259 = vld [vmem:[#allocation2 + $0x5f8] sm:$0xff]
    %v260 = vld [vmem:[#allocation2 + $0x600] sm:$0xff]
    %v261 = vld [vmem:[#allocation2 + $0x608] sm:$0xff]
    %v262 = vld [vmem:[#allocation2 + $0x610] sm:$0xff]
    %v263 = vld [vmem:[#allocation2 + $0x618] sm:$0xff]
    %v264 = vld [vmem:[%s2] sm:$0xf]
    %v266 = vlaneseq
    %v267 = vshrl.u32 %v266, 7
    %v268 = vsub.s32 0, %v267
    %v269 = vrot.slane %v264, %v268
    %v270 = vlaneseq
    %v271 = vshrl.u32 %v270, 7
    %v272 = vsub.s32 1, %v271
    %v273 = vrot.slane %v264, %v272
    %v274 = vlaneseq
    %v275 = vshrl.u32 %v274, 7
    %v276 = vsub.s32 2, %v275
    %v277 = vrot.slane %v264, %v276
    %v278 = vlaneseq
    %v279 = vshrl.u32 %v278, 7
    %v280 = vsub.s32 3, %v279
    %v281 = vrot.slane %v264, %v280
    %v482 = vunpack.c.l.b16 %v68
    %v483 = vunpack.c.h.b16 %v68
    %v484 = vunpack.c.l.b16 %v69
    %v485 = vunpack.c.h.b16 %v69
    %v486 = vunpack.c.l.b16 %v70
    %v487 = vunpack.c.h.b16 %v70
    %v488 = vunpack.c.l.b16 %v71
    %v489 = vunpack.c.h.b16 %v71
    %v490 = vunpack.c.l.b16 %v72
    %v491 = vunpack.c.h.b16 %v72
    %v492 = vunpack.c.l.b16 %v73
    %v493 = vunpack.c.h.b16 %v73
    %v494 = vunpack.c.l.b16 %v74
    %v495 = vunpack.c.h.b16 %v74
    %v496 = vunpack.c.l.b16 %v75
    %v497 = vunpack.c.h.b16 %v75
    %v498 = vunpack.c.l.b16 %v76
    %v499 = vunpack.c.h.b16 %v76
    %v500 = vunpack.c.l.b16 %v77
    %v501 = vunpack.c.h.b16 %v77
    %v502 = vunpack.c.l.b16 %v78
    %v503 = vunpack.c.h.b16 %v78
    %v504 = vunpack.c.l.b16 %v79
    %v505 = vunpack.c.h.b16 %v79
    %v506 = vunpack.c.l.b16 %v80
    %v507 = vunpack.c.h.b16 %v80
    %v508 = vunpack.c.l.b16 %v81
    %v509 = vunpack.c.h.b16 %v81
    %v510 = vunpack.c.l.b16 %v82
    %v511 = vunpack.c.h.b16 %v82
    %v512 = vunpack.c.l.b16 %v83
    %v513 = vunpack.c.h.b16 %v83
    %v514 = vunpack.c.l.b16 %v84
    %v515 = vunpack.c.h.b16 %v84
    %v516 = vunpack.c.l.b16 %v85
    %v517 = vunpack.c.h.b16 %v85
    %v518 = vunpack.c.l.b16 %v86
    %v519 = vunpack.c.h.b16 %v86
    %v520 = vunpack.c.l.b16 %v87
    %v521 = vunpack.c.h.b16 %v87
    %v522 = vunpack.c.l.b16 %v88
    %v523 = vunpack.c.h.b16 %v88
    %v524 = vunpack.c.l.b16 %v89
    %v525 = vunpack.c.h.b16 %v89
    %v526 = vunpack.c.l.b16 %v90
    %v527 = vunpack.c.h.b16 %v90
    %v528 = vunpack.c.l.b16 %v91
    %v529 = vunpack.c.h.b16 %v91
    %v530 = vunpack.c.l.b16 %v92
    %v531 = vunpack.c.h.b16 %v92
    %v532 = vunpack.c.l.b16 %v93
    %v533 = vunpack.c.h.b16 %v93
    %v534 = vunpack.c.l.b16 %v94
    %v535 = vunpack.c.h.b16 %v94
    %v536 = vunpack.c.l.b16 %v95
    %v537 = vunpack.c.h.b16 %v95
    %v538 = vunpack.c.l.b16 %v96
    %v539 = vunpack.c.h.b16 %v96
    %v540 = vunpack.c.l.b16 %v97
    %v541 = vunpack.c.h.b16 %v97
    %v542 = vunpack.c.l.b16 %v98
    %v543 = vunpack.c.h.b16 %v98
    %v544 = vunpack.c.l.b16 %v99
    %v545 = vunpack.c.h.b16 %v99
    %v546 = vunpack.c.l.b16 %v100
    %v547 = vunpack.c.h.b16 %v100
    %v548 = vunpack.c.l.b16 %v101
    %v549 = vunpack.c.h.b16 %v101
    %v550 = vunpack.c.l.b16 %v102
    %v551 = vunpack.c.h.b16 %v102
    %v552 = vunpack.c.l.b16 %v103
    %v553 = vunpack.c.h.b16 %v103
    %v554 = vunpack.c.l.b16 %v104
    %v555 = vunpack.c.h.b16 %v104
    %v556 = vunpack.c.l.b16 %v105
    %v557 = vunpack.c.h.b16 %v105
    %v558 = vunpack.c.l.b16 %v106
    %v559 = vunpack.c.h.b16 %v106
    %v560 = vunpack.c.l.b16 %v107
    %v561 = vunpack.c.h.b16 %v107
    %v562 = vunpack.c.l.b16 %v108
    %v563 = vunpack.c.h.b16 %v108
    %v564 = vunpack.c.l.b16 %v109
    %v565 = vunpack.c.h.b16 %v109
    %v566 = vunpack.c.l.b16 %v110
    %v567 = vunpack.c.h.b16 %v110
    %v568 = vunpack.c.l.b16 %v111
    %v569 = vunpack.c.h.b16 %v111
    %v570 = vunpack.c.l.b16 %v112
    %v571 = vunpack.c.h.b16 %v112
    %v572 = vunpack.c.l.b16 %v113
    %v573 = vunpack.c.h.b16 %v113
    %v574 = vunpack.c.l.b16 %v114
    %v575 = vunpack.c.h.b16 %v114
    %v576 = vunpack.c.l.b16 %v115
    %v577 = vunpack.c.h.b16 %v115
    %v578 = vunpack.c.l.b16 %v116
    %v579 = vunpack.c.h.b16 %v116
    %v580 = vunpack.c.l.b16 %v117
    %v581 = vunpack.c.h.b16 %v117
    %v582 = vunpack.c.l.b16 %v118
    %v583 = vunpack.c.h.b16 %v118
    %v584 = vunpack.c.l.b16 %v119
    %v585 = vunpack.c.h.b16 %v119
    %v586 = vunpack.c.l.b16 %v120
    %v587 = vunpack.c.h.b16 %v120
    %v588 = vunpack.c.l.b16 %v121
    %v589 = vunpack.c.h.b16 %v121
    %v590 = vunpack.c.l.b16 %v122
    %v591 = vunpack.c.h.b16 %v122
    %v592 = vunpack.c.l.b16 %v123
    %v593 = vunpack.c.h.b16 %v123
    %v594 = vunpack.c.l.b16 %v124
    %v595 = vunpack.c.h.b16 %v124
    %v596 = vunpack.c.l.b16 %v125
    %v597 = vunpack.c.h.b16 %v125
    %v598 = vunpack.c.l.b16 %v126
    %v599 = vunpack.c.h.b16 %v126
    %v600 = vunpack.c.l.b16 %v127
    %v601 = vunpack.c.h.b16 %v127
    %v602 = vunpack.c.l.b16 %v128
    %v603 = vunpack.c.h.b16 %v128
    %v604 = vunpack.c.l.b16 %v129
    %v605 = vunpack.c.h.b16 %v129
    %v606 = vunpack.c.l.b16 %v130
    %v607 = vunpack.c.h.b16 %v130
    %v608 = vunpack.c.l.b16 %v131
    %v609 = vunpack.c.h.b16 %v131
    %v610 = vunpack.c.l.b16 %v132
    %v611 = vunpack.c.h.b16 %v132
    %v612 = vunpack.c.l.b16 %v133
    %v613 = vunpack.c.h.b16 %v133
    %v614 = vunpack.c.l.b16 %v134
    %v615 = vunpack.c.h.b16 %v134
    %v616 = vunpack.c.l.b16 %v135
    %v617 = vunpack.c.h.b16 %v135
    %v618 = vunpack.c.l.b16 %v136
    %v619 = vunpack.c.h.b16 %v136
    %v620 = vunpack.c.l.b16 %v137
    %v621 = vunpack.c.h.b16 %v137
    %v622 = vunpack.c.l.b16 %v138
    %v623 = vunpack.c.h.b16 %v138
    %v624 = vunpack.c.l.b16 %v139
    %v625 = vunpack.c.h.b16 %v139
    %v626 = vunpack.c.l.b16 %v140
    %v627 = vunpack.c.h.b16 %v140
    %v628 = vunpack.c.l.b16 %v141
    %v629 = vunpack.c.h.b16 %v141
    %v630 = vunpack.c.l.b16 %v142
    %v631 = vunpack.c.h.b16 %v142
    %v632 = vunpack.c.l.b16 %v143
    %v633 = vunpack.c.h.b16 %v143
    %v634 = vunpack.c.l.b16 %v144
    %v635 = vunpack.c.h.b16 %v144
    %v636 = vunpack.c.l.b16 %v145
    %v637 = vunpack.c.h.b16 %v145
    %v638 = vunpack.c.l.b16 %v146
    %v639 = vunpack.c.h.b16 %v146
    %v640 = vunpack.c.l.b16 %v147
    %v641 = vunpack.c.h.b16 %v147
    %v642 = vunpack.c.l.b16 %v148
    %v643 = vunpack.c.h.b16 %v148
    %v644 = vunpack.c.l.b16 %v149
    %v645 = vunpack.c.h.b16 %v149
    %v646 = vunpack.c.l.b16 %v150
    %v647 = vunpack.c.h.b16 %v150
    %v648 = vunpack.c.l.b16 %v151
    %v649 = vunpack.c.h.b16 %v151
    %v650 = vunpack.c.l.b16 %v152
    %v651 = vunpack.c.h.b16 %v152
    %v652 = vunpack.c.l.b16 %v153
    %v653 = vunpack.c.h.b16 %v153
    %v654 = vunpack.c.l.b16 %v154
    %v655 = vunpack.c.h.b16 %v154
    %v656 = vunpack.c.l.b16 %v155
    %v657 = vunpack.c.h.b16 %v155
    %v658 = vunpack.c.l.b16 %v156
    %v659 = vunpack.c.h.b16 %v156
    %v660 = vunpack.c.l.b16 %v157
    %v661 = vunpack.c.h.b16 %v157
    %v662 = vunpack.c.l.b16 %v158
    %v663 = vunpack.c.h.b16 %v158
    %v664 = vunpack.c.l.b16 %v159
    %v665 = vunpack.c.h.b16 %v159
    %v666 = vunpack.c.l.b16 %v160
    %v667 = vunpack.c.h.b16 %v160
    %v668 = vunpack.c.l.b16 %v161
    %v669 = vunpack.c.h.b16 %v161
    %v670 = vunpack.c.l.b16 %v162
    %v671 = vunpack.c.h.b16 %v162
    %v672 = vunpack.c.l.b16 %v163
    %v673 = vunpack.c.h.b16 %v163
    %v674 = vunpack.c.l.b16 %v164
    %v675 = vunpack.c.h.b16 %v164
    %v676 = vunpack.c.l.b16 %v165
    %v677 = vunpack.c.h.b16 %v165
    %v678 = vunpack.c.l.b16 %v166
    %v679 = vunpack.c.h.b16 %v166
    %v680 = vunpack.c.l.b16 %v167
    %v681 = vunpack.c.h.b16 %v167
    %v682 = vunpack.c.l.b16 %v168
    %v683 = vunpack.c.h.b16 %v168
    %v684 = vunpack.c.l.b16 %v169
    %v685 = vunpack.c.h.b16 %v169
    %v686 = vunpack.c.l.b16 %v170
    %v687 = vunpack.c.h.b16 %v170
    %v688 = vunpack.c.l.b16 %v171
    %v689 = vunpack.c.h.b16 %v171
    %v690 = vunpack.c.l.b16 %v172
    %v691 = vunpack.c.h.b16 %v172
    %v692 = vunpack.c.l.b16 %v173
    %v693 = vunpack.c.h.b16 %v173
    %v694 = vunpack.c.l.b16 %v174
    %v695 = vunpack.c.h.b16 %v174
    %v696 = vunpack.c.l.b16 %v175
    %v697 = vunpack.c.h.b16 %v175
    %v698 = vunpack.c.l.b16 %v176
    %v699 = vunpack.c.h.b16 %v176
    %v700 = vunpack.c.l.b16 %v177
    %v701 = vunpack.c.h.b16 %v177
    %v702 = vunpack.c.l.b16 %v178
    %v703 = vunpack.c.h.b16 %v178
    %v704 = vunpack.c.l.b16 %v179
    %v705 = vunpack.c.h.b16 %v179
    %v706 = vunpack.c.l.b16 %v180
    %v707 = vunpack.c.h.b16 %v180
    %v708 = vunpack.c.l.b16 %v181
    %v709 = vunpack.c.h.b16 %v181
    %v710 = vunpack.c.l.b16 %v182
    %v711 = vunpack.c.h.b16 %v182
    %v712 = vunpack.c.l.b16 %v183
    %v713 = vunpack.c.h.b16 %v183
    %v714 = vunpack.c.l.b16 %v184
    %v715 = vunpack.c.h.b16 %v184
    %v716 = vunpack.c.l.b16 %v185
    %v717 = vunpack.c.h.b16 %v185
    %v718 = vunpack.c.l.b16 %v186
    %v719 = vunpack.c.h.b16 %v186
    %v720 = vunpack.c.l.b16 %v187
    %v721 = vunpack.c.h.b16 %v187
    %v722 = vunpack.c.l.b16 %v188
    %v723 = vunpack.c.h.b16 %v188
    %v724 = vunpack.c.l.b16 %v189
    %v725 = vunpack.c.h.b16 %v189
    %v726 = vunpack.c.l.b16 %v190
    %v727 = vunpack.c.h.b16 %v190
    %v728 = vunpack.c.l.b16 %v191
    %v729 = vunpack.c.h.b16 %v191
    %v730 = vunpack.c.l.b16 %v192
    %v731 = vunpack.c.h.b16 %v192
    %v732 = vunpack.c.l.b16 %v193
    %v733 = vunpack.c.h.b16 %v193
    %v734 = vunpack.c.l.b16 %v194
    %v735 = vunpack.c.h.b16 %v194
    %v736 = vunpack.c.l.b16 %v195
    %v737 = vunpack.c.h.b16 %v195
    %v738 = vunpack.c.l.b16 %v196
    %v739 = vunpack.c.h.b16 %v196
    %v740 = vunpack.c.l.b16 %v197
    %v741 = vunpack.c.h.b16 %v197
    %v742 = vunpack.c.l.b16 %v198
    %v743 = vunpack.c.h.b16 %v198
    %v744 = vunpack.c.l.b16 %v199
    %v745 = vunpack.c.h.b16 %v199
    %v746 = vunpack.c.l.b16 %v200
    %v747 = vunpack.c.h.b16 %v200
    %v748 = vunpack.c.l.b16 %v201
    %v749 = vunpack.c.h.b16 %v201
    %v750 = vunpack.c.l.b16 %v202
    %v751 = vunpack.c.h.b16 %v202
    %v752 = vunpack.c.l.b16 %v203
    %v753 = vunpack.c.h.b16 %v203
    %v754 = vunpack.c.l.b16 %v204
    %v755 = vunpack.c.h.b16 %v204
    %v756 = vunpack.c.l.b16 %v205
    %v757 = vunpack.c.h.b16 %v205
    %v758 = vunpack.c.l.b16 %v206
    %v759 = vunpack.c.h.b16 %v206
    %v760 = vunpack.c.l.b16 %v207
    %v761 = vunpack.c.h.b16 %v207
    %v762 = vunpack.c.l.b16 %v208
    %v763 = vunpack.c.h.b16 %v208
    %v764 = vunpack.c.l.b16 %v209
    %v765 = vunpack.c.h.b16 %v209
    %v766 = vunpack.c.l.b16 %v210
    %v767 = vunpack.c.h.b16 %v210
    %v768 = vunpack.c.l.b16 %v211
    %v769 = vunpack.c.h.b16 %v211
    %v770 = vunpack.c.l.b16 %v212
    %v771 = vunpack.c.h.b16 %v212
    %v772 = vunpack.c.l.b16 %v213
    %v773 = vunpack.c.h.b16 %v213
    %v774 = vunpack.c.l.b16 %v214
    %v775 = vunpack.c.h.b16 %v214
    %v776 = vunpack.c.l.b16 %v215
    %v777 = vunpack.c.h.b16 %v215
    %v778 = vunpack.c.l.b16 %v216
    %v779 = vunpack.c.h.b16 %v216
    %v780 = vunpack.c.l.b16 %v217
    %v781 = vunpack.c.h.b16 %v217
    %v782 = vunpack.c.l.b16 %v218
    %v783 = vunpack.c.h.b16 %v218
    %v784 = vunpack.c.l.b16 %v219
    %v785 = vunpack.c.h.b16 %v219
    %v786 = vunpack.c.l.b16 %v220
    %v787 = vunpack.c.h.b16 %v220
    %v788 = vunpack.c.l.b16 %v221
    %v789 = vunpack.c.h.b16 %v221
    %v790 = vunpack.c.l.b16 %v222
    %v791 = vunpack.c.h.b16 %v222
    %v792 = vunpack.c.l.b16 %v223
    %v793 = vunpack.c.h.b16 %v223
    %v794 = vunpack.c.l.b16 %v224
    %v795 = vunpack.c.h.b16 %v224
    %v796 = vunpack.c.l.b16 %v225
    %v797 = vunpack.c.h.b16 %v225
    %v798 = vunpack.c.l.b16 %v226
    %v799 = vunpack.c.h.b16 %v226
    %v800 = vunpack.c.l.b16 %v227
    %v801 = vunpack.c.h.b16 %v227
    %v802 = vunpack.c.l.b16 %v228
    %v803 = vunpack.c.h.b16 %v228
    %v804 = vunpack.c.l.b16 %v229
    %v805 = vunpack.c.h.b16 %v229
    %v806 = vunpack.c.l.b16 %v230
    %v807 = vunpack.c.h.b16 %v230
    %v808 = vunpack.c.l.b16 %v231
    %v809 = vunpack.c.h.b16 %v231
    %v810 = vunpack.c.l.b16 %v232
    %v811 = vunpack.c.h.b16 %v232
    %v812 = vunpack.c.l.b16 %v233
    %v813 = vunpack.c.h.b16 %v233
    %v814 = vunpack.c.l.b16 %v234
    %v815 = vunpack.c.h.b16 %v234
    %v816 = vunpack.c.l.b16 %v235
    %v817 = vunpack.c.h.b16 %v235
    %v818 = vunpack.c.l.b16 %v236
    %v819 = vunpack.c.h.b16 %v236
    %v820 = vunpack.c.l.b16 %v237
    %v821 = vunpack.c.h.b16 %v237
    %v822 = vunpack.c.l.b16 %v238
    %v823 = vunpack.c.h.b16 %v238
    %v824 = vunpack.c.l.b16 %v239
    %v825 = vunpack.c.h.b16 %v239
    %v826 = vunpack.c.l.b16 %v240
    %v827 = vunpack.c.h.b16 %v240
    %v828 = vunpack.c.l.b16 %v241
    %v829 = vunpack.c.h.b16 %v241
    %v830 = vunpack.c.l.b16 %v242
    %v831 = vunpack.c.h.b16 %v242
    %v832 = vunpack.c.l.b16 %v243
    %v833 = vunpack.c.h.b16 %v243
    %v834 = vunpack.c.l.b16 %v244
    %v835 = vunpack.c.h.b16 %v244
    %v836 = vunpack.c.l.b16 %v245
    %v837 = vunpack.c.h.b16 %v245
    %v838 = vunpack.c.l.b16 %v246
    %v839 = vunpack.c.h.b16 %v246
    %v840 = vunpack.c.l.b16 %v247
    %v841 = vunpack.c.h.b16 %v247
    %v842 = vunpack.c.l.b16 %v248
    %v843 = vunpack.c.h.b16 %v248
    %v844 = vunpack.c.l.b16 %v249
    %v845 = vunpack.c.h.b16 %v249
    %v846 = vunpack.c.l.b16 %v250
    %v847 = vunpack.c.h.b16 %v250
    %v848 = vunpack.c.l.b16 %v251
    %v849 = vunpack.c.h.b16 %v251
    %v850 = vunpack.c.l.b16 %v252
    %v851 = vunpack.c.h.b16 %v252
    %v852 = vunpack.c.l.b16 %v253
    %v853 = vunpack.c.h.b16 %v253
    %v854 = vunpack.c.l.b16 %v254
    %v855 = vunpack.c.h.b16 %v254
    %v856 = vunpack.c.l.b16 %v255
    %v857 = vunpack.c.h.b16 %v255
    %v858 = vunpack.c.l.b16 %v256
    %v859 = vunpack.c.h.b16 %v256
    %v860 = vunpack.c.l.b16 %v257
    %v861 = vunpack.c.h.b16 %v257
    %v862 = vunpack.c.l.b16 %v258
    %v863 = vunpack.c.h.b16 %v258
    %v864 = vunpack.c.l.b16 %v259
    %v865 = vunpack.c.h.b16 %v259
    %v866 = vunpack.c.l.b16 %v260
    %v867 = vunpack.c.h.b16 %v260
    %v868 = vunpack.c.l.b16 %v261
    %v869 = vunpack.c.h.b16 %v261
    %v870 = vunpack.c.l.b16 %v262
    %v871 = vunpack.c.h.b16 %v262
    %v872 = vunpack.c.l.b16 %v263
    %v873 = vunpack.c.h.b16 %v263
    %v874 = vpack.c.b16 %v486, %v482
    %v875 = vpack.c.b16 %v487, %v483
    %v876 = vpack.c.b16 %v488, %v484
    %v877 = vpack.c.b16 %v489, %v485
    %v878 = vpack.c.b16 %v494, %v490
    %v879 = vpack.c.b16 %v495, %v491
    %v880 = vpack.c.b16 %v496, %v492
    %v881 = vpack.c.b16 %v497, %v493
    %v882 = vpack.c.b16 %v502, %v498
    %v883 = vpack.c.b16 %v503, %v499
    %v884 = vpack.c.b16 %v504, %v500
    %v885 = vpack.c.b16 %v505, %v501
    %v886 = vpack.c.b16 %v510, %v506
    %v887 = vpack.c.b16 %v511, %v507
    %v888 = vpack.c.b16 %v512, %v508
    %v889 = vpack.c.b16 %v513, %v509
    %v890 = vpack.c.b16 %v518, %v514
    %v891 = vpack.c.b16 %v519, %v515
    %v892 = vpack.c.b16 %v520, %v516
    %v893 = vpack.c.b16 %v521, %v517
    %v894 = vpack.c.b16 %v526, %v522
    %v895 = vpack.c.b16 %v527, %v523
    %v896 = vpack.c.b16 %v528, %v524
    %v897 = vpack.c.b16 %v529, %v525
    %v898 = vpack.c.b16 %v534, %v530
    %v899 = vpack.c.b16 %v535, %v531
    %v900 = vpack.c.b16 %v536, %v532
    %v901 = vpack.c.b16 %v537, %v533
    %v902 = vpack.c.b16 %v542, %v538
    %v903 = vpack.c.b16 %v543, %v539
    %v904 = vpack.c.b16 %v544, %v540
    %v905 = vpack.c.b16 %v545, %v541
    %v906 = vpack.c.b16 %v550, %v546
    %v907 = vpack.c.b16 %v551, %v547
    %v908 = vpack.c.b16 %v552, %v548
    %v909 = vpack.c.b16 %v553, %v549
    %v910 = vpack.c.b16 %v558, %v554
    %v911 = vpack.c.b16 %v559, %v555
    %v912 = vpack.c.b16 %v560, %v556
    %v913 = vpack.c.b16 %v561, %v557
    %v914 = vpack.c.b16 %v566, %v562
    %v915 = vpack.c.b16 %v567, %v563
    %v916 = vpack.c.b16 %v568, %v564
    %v917 = vpack.c.b16 %v569, %v565
    %v918 = vpack.c.b16 %v574, %v570
    %v919 = vpack.c.b16 %v575, %v571
    %v920 = vpack.c.b16 %v576, %v572
    %v921 = vpack.c.b16 %v577, %v573
    %v922 = vpack.c.b16 %v582, %v578
    %v923 = vpack.c.b16 %v583, %v579
    %v924 = vpack.c.b16 %v584, %v580
    %v925 = vpack.c.b16 %v585, %v581
    %v926 = vpack.c.b16 %v590, %v586
    %v927 = vpack.c.b16 %v591, %v587
    %v928 = vpack.c.b16 %v592, %v588
    %v929 = vpack.c.b16 %v593, %v589
    %v930 = vpack.c.b16 %v598, %v594
    %v931 = vpack.c.b16 %v599, %v595
    %v932 = vpack.c.b16 %v600, %v596
    %v933 = vpack.c.b16 %v601, %v597
    %v934 = vpack.c.b16 %v606, %v602
    %v935 = vpack.c.b16 %v607, %v603
    %v936 = vpack.c.b16 %v608, %v604
    %v937 = vpack.c.b16 %v609, %v605
    %v938 = vpack.c.b16 %v614, %v610
    %v939 = vpack.c.b16 %v615, %v611
    %v940 = vpack.c.b16 %v616, %v612
    %v941 = vpack.c.b16 %v617, %v613
    %v942 = vpack.c.b16 %v622, %v618
    %v943 = vpack.c.b16 %v623, %v619
    %v944 = vpack.c.b16 %v624, %v620
    %v945 = vpack.c.b16 %v625, %v621
    %v946 = vpack.c.b16 %v630, %v626
    %v947 = vpack.c.b16 %v631, %v627
    %v948 = vpack.c.b16 %v632, %v628
    %v949 = vpack.c.b16 %v633, %v629
    %v950 = vpack.c.b16 %v638, %v634
    %v951 = vpack.c.b16 %v639, %v635
    %v952 = vpack.c.b16 %v640, %v636
    %v953 = vpack.c.b16 %v641, %v637
    %v954 = vpack.c.b16 %v646, %v642
    %v955 = vpack.c.b16 %v647, %v643
    %v956 = vpack.c.b16 %v648, %v644
    %v957 = vpack.c.b16 %v649, %v645
    %v958 = vpack.c.b16 %v654, %v650
    %v959 = vpack.c.b16 %v655, %v651
    %v960 = vpack.c.b16 %v656, %v652
    %v961 = vpack.c.b16 %v657, %v653
    %v962 = vpack.c.b16 %v662, %v658
    %v963 = vpack.c.b16 %v663, %v659
    %v964 = vpack.c.b16 %v664, %v660
    %v965 = vpack.c.b16 %v665, %v661
    %v966 = vpack.c.b16 %v670, %v666
    %v967 = vpack.c.b16 %v671, %v667
    %v968 = vpack.c.b16 %v672, %v668
    %v969 = vpack.c.b16 %v673, %v669
    %v970 = vpack.c.b16 %v678, %v674
    %v971 = vpack.c.b16 %v679, %v675
    %v972 = vpack.c.b16 %v680, %v676
    %v973 = vpack.c.b16 %v681, %v677
    %v974 = vpack.c.b16 %v686, %v682
    %v975 = vpack.c.b16 %v687, %v683
    %v976 = vpack.c.b16 %v688, %v684
    %v977 = vpack.c.b16 %v689, %v685
    %v978 = vpack.c.b16 %v694, %v690
    %v979 = vpack.c.b16 %v695, %v691
    %v980 = vpack.c.b16 %v696, %v692
    %v981 = vpack.c.b16 %v697, %v693
    %v982 = vpack.c.b16 %v702, %v698
    %v983 = vpack.c.b16 %v703, %v699
    %v984 = vpack.c.b16 %v704, %v700
    %v985 = vpack.c.b16 %v705, %v701
    %v986 = vpack.c.b16 %v710, %v706
    %v987 = vpack.c.b16 %v711, %v707
    %v988 = vpack.c.b16 %v712, %v708
    %v989 = vpack.c.b16 %v713, %v709
    %v990 = vpack.c.b16 %v718, %v714
    %v991 = vpack.c.b16 %v719, %v715
    %v992 = vpack.c.b16 %v720, %v716
    %v993 = vpack.c.b16 %v721, %v717
    %v994 = vpack.c.b16 %v726, %v722
    %v995 = vpack.c.b16 %v727, %v723
    %v996 = vpack.c.b16 %v728, %v724
    %v997 = vpack.c.b16 %v729, %v725
    %v998 = vpack.c.b16 %v734, %v730
    %v999 = vpack.c.b16 %v735, %v731
    %v1000 = vpack.c.b16 %v736, %v732
    %v1001 = vpack.c.b16 %v737, %v733
    %v1002 = vpack.c.b16 %v742, %v738
    %v1003 = vpack.c.b16 %v743, %v739
    %v1004 = vpack.c.b16 %v744, %v740
    %v1005 = vpack.c.b16 %v745, %v741
    %v1006 = vpack.c.b16 %v750, %v746
    %v1007 = vpack.c.b16 %v751, %v747
    %v1008 = vpack.c.b16 %v752, %v748
    %v1009 = vpack.c.b16 %v753, %v749
    %v1010 = vpack.c.b16 %v758, %v754
    %v1011 = vpack.c.b16 %v759, %v755
    %v1012 = vpack.c.b16 %v760, %v756
    %v1013 = vpack.c.b16 %v761, %v757
    %v1014 = vpack.c.b16 %v766, %v762
    %v1015 = vpack.c.b16 %v767, %v763
    %v1016 = vpack.c.b16 %v768, %v764
    %v1017 = vpack.c.b16 %v769, %v765
    %v1018 = vpack.c.b16 %v774, %v770
    %v1019 = vpack.c.b16 %v775, %v771
    %v1020 = vpack.c.b16 %v776, %v772
    %v1021 = vpack.c.b16 %v777, %v773
    %v1022 = vpack.c.b16 %v782, %v778
    %v1023 = vpack.c.b16 %v783, %v779
    %v1024 = vpack.c.b16 %v784, %v780
    %v1025 = vpack.c.b16 %v785, %v781
    %v1026 = vpack.c.b16 %v790, %v786
    %v1027 = vpack.c.b16 %v791, %v787
    %v1028 = vpack.c.b16 %v792, %v788
    %v1029 = vpack.c.b16 %v793, %v789
    %v1030 = vpack.c.b16 %v798, %v794
    %v1031 = vpack.c.b16 %v799, %v795
    %v1032 = vpack.c.b16 %v800, %v796
    %v1033 = vpack.c.b16 %v801, %v797
    %v1034 = vpack.c.b16 %v806, %v802
    %v1035 = vpack.c.b16 %v807, %v803
    %v1036 = vpack.c.b16 %v808, %v804
    %v1037 = vpack.c.b16 %v809, %v805
    %v1038 = vpack.c.b16 %v814, %v810
    %v1039 = vpack.c.b16 %v815, %v811
    %v1040 = vpack.c.b16 %v816, %v812
    %v1041 = vpack.c.b16 %v817, %v813
    %v1042 = vpack.c.b16 %v822, %v818
    %v1043 = vpack.c.b16 %v823, %v819
    %v1044 = vpack.c.b16 %v824, %v820
    %v1045 = vpack.c.b16 %v825, %v821
    %v1046 = vpack.c.b16 %v830, %v826
    %v1047 = vpack.c.b16 %v831, %v827
    %v1048 = vpack.c.b16 %v832, %v828
    %v1049 = vpack.c.b16 %v833, %v829
    %v1050 = vpack.c.b16 %v838, %v834
    %v1051 = vpack.c.b16 %v839, %v835
    %v1052 = vpack.c.b16 %v840, %v836
    %v1053 = vpack.c.b16 %v841, %v837
    %v1054 = vpack.c.b16 %v846, %v842
    %v1055 = vpack.c.b16 %v847, %v843
    %v1056 = vpack.c.b16 %v848, %v844
    %v1057 = vpack.c.b16 %v849, %v845
    %v1058 = vpack.c.b16 %v854, %v850
    %v1059 = vpack.c.b16 %v855, %v851
    %v1060 = vpack.c.b16 %v856, %v852
    %v1061 = vpack.c.b16 %v857, %v853
    %v1062 = vpack.c.b16 %v862, %v858
    %v1063 = vpack.c.b16 %v863, %v859
    %v1064 = vpack.c.b16 %v864, %v860
    %v1065 = vpack.c.b16 %v865, %v861
    %v1066 = vpack.c.b16 %v870, %v866
    %v1067 = vpack.c.b16 %v871, %v867
    %v1068 = vpack.c.b16 %v872, %v868
    %v1069 = vpack.c.b16 %v873, %v869
    %vm1266 = vcmask 130048
    %v1268 = vsel %vm1266, %v67, 0
    %1270 = vmatprep.subr.bf16.mxu0 %v903
    %1271 = vmatpush1.bf16.msra.mxu0 %v902
    %1272 = vmatprep.subr.bf16.mxu0 %v899
    %1273 = vmatpush1.bf16.msra.mxu0 %v898
    %1274 = vmatprep.subr.bf16.mxu0 %v895
    %1275 = vmatpush1.bf16.msra.mxu0 %v894
    %1276 = vmatprep.subr.bf16.mxu0 %v891
    %1277 = vmatpush1.bf16.msra.mxu0 %v890
    %1278 = vmatprep.subr.bf16.mxu0 %v887
    %1279 = vmatpush1.bf16.msra.mxu0 %v886
    %1280 = vmatprep.subr.bf16.mxu0 %v883
    %1281 = vmatpush1.bf16.msra.mxu0 %v882
    %1282 = vmatprep.subr.bf16.mxu0 %v879
    %1283 = vmatpush1.bf16.msra.mxu0 %v878
    %1284 = vmatprep.subr.bf16.mxu0 %v875
    %1285 = vmatpush1.bf16.msra.mxu0 %v874
    %1286 = vmatprep.subr.bf16.mxu0 %v935
    %1287 = vmatpush2.bf16.msra.mxu0 %v934
    %1288 = vmatprep.subr.bf16.mxu0 %v931
    %1289 = vmatpush2.bf16.msra.mxu0 %v930
    %1290 = vmatprep.subr.bf16.mxu0 %v927
    %1291 = vmatpush2.bf16.msra.mxu0 %v926
    %1292 = vmatprep.subr.bf16.mxu0 %v923
    %1293 = vmatpush2.bf16.msra.mxu0 %v922
    %1294 = vmatprep.subr.bf16.mxu0 %v919
    %1295 = vmatpush2.bf16.msra.mxu0 %v918
    %1296 = vmatprep.subr.bf16.mxu0 %v915
    %1297 = vmatpush2.bf16.msra.mxu0 %v914
    %1298 = vmatprep.subr.bf16.mxu0 %v911
    %1299 = vmatpush2.bf16.msra.mxu0 %v910
    %1300 = vmatprep.subr.bf16.mxu0 %v907
    %1301 = vmatpush2.bf16.msra.mxu0 %v906
    %1302 = vmatprep.mubr.bf16.mxu0 %v62
    %1303 = vmatmul.mubr.bf16.gmra.mxu0 %v61
    %v1304 = vpop.f32.mrf.mxu0
    %v1305 = vadd.f32 %v269, %v1304
    %v1306 = vpop.f32.mrf.mxu0
    %v1307 = vadd.f32 %v273, %v1306
    %v1308 = vpop.f32.mrf.mxu0
    %v1309 = vadd.f32 %v269, %v1308
    %v1310 = vpop.f32.mrf.mxu0
    %v1311 = vadd.f32 %v273, %v1310
    %1312 = vdwg.mxu0
    %1313 = vmatprep.subr.bf16.mxu0 %v967
    %1314 = vmatpush1.bf16.msra.mxu0 %v966
    %1315 = vmatprep.subr.bf16.mxu0 %v963
    %1316 = vmatpush1.bf16.msra.mxu0 %v962
    %1317 = vmatprep.subr.bf16.mxu0 %v959
    %1318 = vmatpush1.bf16.msra.mxu0 %v958
    %1319 = vmatprep.subr.bf16.mxu0 %v955
    %1320 = vmatpush1.bf16.msra.mxu0 %v954
    %1321 = vmatprep.subr.bf16.mxu0 %v951
    %1322 = vmatpush1.bf16.msra.mxu0 %v950
    %1323 = vmatprep.subr.bf16.mxu0 %v947
    %1324 = vmatpush1.bf16.msra.mxu0 %v946
    %1325 = vmatprep.subr.bf16.mxu0 %v943
    %1326 = vmatpush1.bf16.msra.mxu0 %v942
    %1327 = vmatprep.subr.bf16.mxu0 %v939
    %1328 = vmatpush1.bf16.msra.mxu0 %v938
    %1329 = vmatprep.subr.bf16.mxu0 %v999
    %1330 = vmatpush2.bf16.msra.mxu0 %v998
    %1331 = vmatprep.subr.bf16.mxu0 %v995
    %1332 = vmatpush2.bf16.msra.mxu0 %v994
    %1333 = vmatprep.subr.bf16.mxu0 %v991
    %1334 = vmatpush2.bf16.msra.mxu0 %v990
    %1335 = vmatprep.subr.bf16.mxu0 %v987
    %1336 = vmatpush2.bf16.msra.mxu0 %v986
    %1337 = vmatprep.subr.bf16.mxu0 %v983
    %1338 = vmatpush2.bf16.msra.mxu0 %v982
    %1339 = vmatprep.subr.bf16.mxu0 %v979
    %1340 = vmatpush2.bf16.msra.mxu0 %v978
    %1341 = vmatprep.subr.bf16.mxu0 %v975
    %1342 = vmatpush2.bf16.msra.mxu0 %v974
    %1343 = vmatprep.subr.bf16.mxu0 %v971
    %1344 = vmatpush2.bf16.msra.mxu0 %v970
    %1345 = vmatprep.mubr.bf16.mxu0 %v64
    %1346 = vmatmul.mubr.bf16.gmra.mxu0 %v63
    %v1347 = vpop.f32.mrf.mxu0
    %v1348 = vadd.f32 %v1305, %v1347
    %v1349 = vpop.f32.mrf.mxu0
    %v1350 = vadd.f32 %v1307, %v1349
    %v1351 = vpop.f32.mrf.mxu0
    %v1352 = vadd.f32 %v1309, %v1351
    %v1353 = vpop.f32.mrf.mxu0
    %v1354 = vadd.f32 %v1311, %v1353
    %1355 = vdwg.mxu0
    %1356 = vmatprep.subr.bf16.mxu0 %v1031
    %1357 = vmatpush1.bf16.msra.mxu0 %v1030
    %1358 = vmatprep.subr.bf16.mxu0 %v1027
    %1359 = vmatpush1.bf16.msra.mxu0 %v1026
    %1360 = vmatprep.subr.bf16.mxu0 %v1023
    %1361 = vmatpush1.bf16.msra.mxu0 %v1022
    %1362 = vmatprep.subr.bf16.mxu0 %v1019
    %1363 = vmatpush1.bf16.msra.mxu0 %v1018
    %1364 = vmatprep.subr.bf16.mxu0 %v1015
    %1365 = vmatpush1.bf16.msra.mxu0 %v1014
    %1366 = vmatprep.subr.bf16.mxu0 %v1011
    %1367 = vmatpush1.bf16.msra.mxu0 %v1010
    %1368 = vmatprep.subr.bf16.mxu0 %v1007
    %1369 = vmatpush1.bf16.msra.mxu0 %v1006
    %1370 = vmatprep.subr.bf16.mxu0 %v1003
    %1371 = vmatpush1.bf16.msra.mxu0 %v1002
    %1372 = vmatprep.subr.bf16.mxu0 %v1063
    %1373 = vmatpush2.bf16.msra.mxu0 %v1062
    %1374 = vmatprep.subr.bf16.mxu0 %v1059
    %1375 = vmatpush2.bf16.msra.mxu0 %v1058
    %1376 = vmatprep.subr.bf16.mxu0 %v1055
    %1377 = vmatpush2.bf16.msra.mxu0 %v1054
    %1378 = vmatprep.subr.bf16.mxu0 %v1051
    %1379 = vmatpush2.bf16.msra.mxu0 %v1050
    %1380 = vmatprep.subr.bf16.mxu0 %v1047
    %1381 = vmatpush2.bf16.msra.mxu0 %v1046
    %1382 = vmatprep.subr.bf16.mxu0 %v1043
    %1383 = vmatpush2.bf16.msra.mxu0 %v1042
    %1384 = vmatprep.subr.bf16.mxu0 %v1039
    %1385 = vmatpush2.bf16.msra.mxu0 %v1038
    %1386 = vmatprep.subr.bf16.mxu0 %v1035
    %1387 = vmatpush2.bf16.msra.mxu0 %v1034
    %1388 = vmatprep.mubr.bf16.mxu0 %v66
    %1389 = vmatmul.mubr.bf16.gmra.mxu0 %v65
    %v1390 = vpop.f32.mrf.mxu0
    %v1391 = vadd.f32 %v1348, %v1390
    %v1392 = vpop.f32.mrf.mxu0
    %v1393 = vadd.f32 %v1350, %v1392
    %v1394 = vpop.f32.mrf.mxu0
    %v1395 = vadd.f32 %v1352, %v1394
    %v1396 = vpop.f32.mrf.mxu0
    %v1397 = vadd.f32 %v1354, %v1396
    %1398 = vdwg.mxu0
    %1399 = vmatprep.subr.bf16.mxu0 0
    %1400 = vmatpush1.bf16.msra.mxu0 0
    %1401 = vmatprep.subr.bf16.mxu0 0
    %1402 = vmatpush1.bf16.msra.mxu0 0
    %1403 = vmatprep.subr.bf16.mxu0 0
    %1404 = vmatpush1.bf16.msra.mxu0 0
    %1405 = vmatprep.subr.bf16.mxu0 0
    %1406 = vmatpush1.bf16.msra.mxu0 0
    %1407 = vmatprep.subr.bf16.mxu0 0
    %1408 = vmatpush1.bf16.msra.mxu0 0
    %1409 = vmatprep.subr.bf16.mxu0 0
    %1410 = vmatpush1.bf16.msra.mxu0 0
    %1411 = vmatprep.subr.bf16.mxu0 0
    %1412 = vmatpush1.bf16.msra.mxu0 0
    %1413 = vmatprep.subr.bf16.mxu0 %v1067
    %1414 = vmatpush1.bf16.msra.mxu0 %v1066
    %1415 = vmatprep.subr.bf16.mxu0 0
    %1416 = vmatpush2.bf16.msra.mxu0 0
    %1417 = vmatprep.subr.bf16.mxu0 0
    %1418 = vmatpush2.bf16.msra.mxu0 0
    %1419 = vmatprep.subr.bf16.mxu0 0
    %1420 = vmatpush2.bf16.msra.mxu0 0
    %1421 = vmatprep.subr.bf16.mxu0 0
    %1422 = vmatpush2.bf16.msra.mxu0 0
    %1423 = vmatprep.subr.bf16.mxu0 0
    %1424 = vmatpush2.bf16.msra.mxu0 0
    %1425 = vmatprep.subr.bf16.mxu0 0
    %1426 = vmatpush2.bf16.msra.mxu0 0
    %1427 = vmatprep.subr.bf16.mxu0 0
    %1428 = vmatpush2.bf16.msra.mxu0 0
    %1429 = vmatprep.subr.bf16.mxu0 0
    %1430 = vmatpush2.bf16.msra.mxu0 0
    %1431 = vmatprep.mubr.bf16.mxu0 0
    %1432 = vmatmul.mubr.bf16.gmra.mxu0 %v1268
    %v1433 = vpop.f32.mrf.mxu0
    %v1434 = vadd.f32 %v1391, %v1433
    %v1435 = vpop.f32.mrf.mxu0
    %v1436 = vadd.f32 %v1393, %v1435
    %v1437 = vpop.f32.mrf.mxu0
    %v1438 = vadd.f32 %v1395, %v1437
    %v1439 = vpop.f32.mrf.mxu0
    %v1440 = vadd.f32 %v1397, %v1439
    %1441 = vdwg.mxu0
    %1442 = vmatprep.subr.bf16.mxu0 %v905
    %1443 = vmatpush1.bf16.msra.mxu0 %v904
    %1444 = vmatprep.subr.bf16.mxu0 %v901
    %1445 = vmatpush1.bf16.msra.mxu0 %v900
    %1446 = vmatprep.subr.bf16.mxu0 %v897
    %1447 = vmatpush1.bf16.msra.mxu0 %v896
    %1448 = vmatprep.subr.bf16.mxu0 %v893
    %1449 = vmatpush1.bf16.msra.mxu0 %v892
    %1450 = vmatprep.subr.bf16.mxu0 %v889
    %1451 = vmatpush1.bf16.msra.mxu0 %v888
    %1452 = vmatprep.subr.bf16.mxu0 %v885
    %1453 = vmatpush1.bf16.msra.mxu0 %v884
    %1454 = vmatprep.subr.bf16.mxu0 %v881
    %1455 = vmatpush1.bf16.msra.mxu0 %v880
    %1456 = vmatprep.subr.bf16.mxu0 %v877
    %1457 = vmatpush1.bf16.msra.mxu0 %v876
    %1458 = vmatprep.subr.bf16.mxu0 %v937
    %1459 = vmatpush2.bf16.msra.mxu0 %v936
    %1460 = vmatprep.subr.bf16.mxu0 %v933
    %1461 = vmatpush2.bf16.msra.mxu0 %v932
    %1462 = vmatprep.subr.bf16.mxu0 %v929
    %1463 = vmatpush2.bf16.msra.mxu0 %v928
    %1464 = vmatprep.subr.bf16.mxu0 %v925
    %1465 = vmatpush2.bf16.msra.mxu0 %v924
    %1466 = vmatprep.subr.bf16.mxu0 %v921
    %1467 = vmatpush2.bf16.msra.mxu0 %v920
    %1468 = vmatprep.subr.bf16.mxu0 %v917
    %1469 = vmatpush2.bf16.msra.mxu0 %v916
    %1470 = vmatprep.subr.bf16.mxu0 %v913
    %1471 = vmatpush2.bf16.msra.mxu0 %v912
    %1472 = vmatprep.subr.bf16.mxu0 %v909
    %1473 = vmatpush2.bf16.msra.mxu0 %v908
    %1474 = vmatprep.mubr.bf16.mxu0 %v62
    %1475 = vmatmul.mubr.bf16.gmra.mxu0 %v61
    %v1476 = vpop.f32.mrf.mxu0
    %v1477 = vadd.f32 %v277, %v1476
    %v1478 = vpop.f32.mrf.mxu0
    %v1479 = vadd.f32 %v281, %v1478
    %v1480 = vpop.f32.mrf.mxu0
    %v1481 = vadd.f32 %v277, %v1480
    %v1482 = vpop.f32.mrf.mxu0
    %v1483 = vadd.f32 %v281, %v1482
    %1484 = vdwg.mxu0
    %1485 = vmatprep.subr.bf16.mxu0 %v969
    %1486 = vmatpush1.bf16.msra.mxu0 %v968
    %1487 = vmatprep.subr.bf16.mxu0 %v965
    %1488 = vmatpush1.bf16.msra.mxu0 %v964
    %1489 = vmatprep.subr.bf16.mxu0 %v961
    %1490 = vmatpush1.bf16.msra.mxu0 %v960
    %1491 = vmatprep.subr.bf16.mxu0 %v957
    %1492 = vmatpush1.bf16.msra.mxu0 %v956
    %1493 = vmatprep.subr.bf16.mxu0 %v953
    %1494 = vmatpush1.bf16.msra.mxu0 %v952
    %1495 = vmatprep.subr.bf16.mxu0 %v949
    %1496 = vmatpush1.bf16.msra.mxu0 %v948
    %1497 = vmatprep.subr.bf16.mxu0 %v945
    %1498 = vmatpush1.bf16.msra.mxu0 %v944
    %1499 = vmatprep.subr.bf16.mxu0 %v941
    %1500 = vmatpush1.bf16.msra.mxu0 %v940
    %1501 = vmatprep.subr.bf16.mxu0 %v1001
    %1502 = vmatpush2.bf16.msra.mxu0 %v1000
    %1503 = vmatprep.subr.bf16.mxu0 %v997
    %1504 = vmatpush2.bf16.msra.mxu0 %v996
    %1505 = vmatprep.subr.bf16.mxu0 %v993
    %1506 = vmatpush2.bf16.msra.mxu0 %v992
    %1507 = vmatprep.subr.bf16.mxu0 %v989
    %1508 = vmatpush2.bf16.msra.mxu0 %v988
    %1509 = vmatprep.subr.bf16.mxu0 %v985
    %1510 = vmatpush2.bf16.msra.mxu0 %v984
    %1511 = vmatprep.subr.bf16.mxu0 %v981
    %1512 = vmatpush2.bf16.msra.mxu0 %v980
    %1513 = vmatprep.subr.bf16.mxu0 %v977
    %1514 = vmatpush2.bf16.msra.mxu0 %v976
    %1515 = vmatprep.subr.bf16.mxu0 %v973
    %1516 = vmatpush2.bf16.msra.mxu0 %v972
    %1517 = vmatprep.mubr.bf16.mxu0 %v64
    %1518 = vmatmul.mubr.bf16.gmra.mxu0 %v63
    %v1519 = vpop.f32.mrf.mxu0
    %v1520 = vadd.f32 %v1477, %v1519
    %v1521 = vpop.f32.mrf.mxu0
    %v1522 = vadd.f32 %v1479, %v1521
    %v1523 = vpop.f32.mrf.mxu0
    %v1524 = vadd.f32 %v1481, %v1523
    %v1525 = vpop.f32.mrf.mxu0
    %v1526 = vadd.f32 %v1483, %v1525
    %1527 = vdwg.mxu0
    %1528 = vmatprep.subr.bf16.mxu0 %v1033
    %1529 = vmatpush1.bf16.msra.mxu0 %v1032
    %1530 = vmatprep.subr.bf16.mxu0 %v1029
    %1531 = vmatpush1.bf16.msra.mxu0 %v1028
    %1532 = vmatprep.subr.bf16.mxu0 %v1025
    %1533 = vmatpush1.bf16.msra.mxu0 %v1024
    %1534 = vmatprep.subr.bf16.mxu0 %v1021
    %1535 = vmatpush1.bf16.msra.mxu0 %v1020
    %1536 = vmatprep.subr.bf16.mxu0 %v1017
    %1537 = vmatpush1.bf16.msra.mxu0 %v1016
    %1538 = vmatprep.subr.bf16.mxu0 %v1013
    %1539 = vmatpush1.bf16.msra.mxu0 %v1012
    %1540 = vmatprep.subr.bf16.mxu0 %v1009
    %1541 = vmatpush1.bf16.msra.mxu0 %v1008
    %1542 = vmatprep.subr.bf16.mxu0 %v1005
    %1543 = vmatpush1.bf16.msra.mxu0 %v1004
    %1544 = vmatprep.subr.bf16.mxu0 %v1065
    %1545 = vmatpush2.bf16.msra.mxu0 %v1064
    %1546 = vmatprep.subr.bf16.mxu0 %v1061
    %1547 = vmatpush2.bf16.msra.mxu0 %v1060
    %1548 = vmatprep.subr.bf16.mxu0 %v1057
    %1549 = vmatpush2.bf16.msra.mxu0 %v1056
    %1550 = vmatprep.subr.bf16.mxu0 %v1053
    %1551 = vmatpush2.bf16.msra.mxu0 %v1052
    %1552 = vmatprep.subr.bf16.mxu0 %v1049
    %1553 = vmatpush2.bf16.msra.mxu0 %v1048
    %1554 = vmatprep.subr.bf16.mxu0 %v1045
    %1555 = vmatpush2.bf16.msra.mxu0 %v1044
    %1556 = vmatprep.subr.bf16.mxu0 %v1041
    %1557 = vmatpush2.bf16.msra.mxu0 %v1040
    %1558 = vmatprep.subr.bf16.mxu0 %v1037
    %1559 = vmatpush2.bf16.msra.mxu0 %v1036
    %1560 = vmatprep.mubr.bf16.mxu0 %v66
    %1561 = vmatmul.mubr.bf16.gmra.mxu0 %v65
    %v1562 = vpop.f32.mrf.mxu0
    %v1563 = vadd.f32 %v1520, %v1562
    %v1564 = vpop.f32.mrf.mxu0
    %v1565 = vadd.f32 %v1522, %v1564
    %v1566 = vpop.f32.mrf.mxu0
    %v1567 = vadd.f32 %v1524, %v1566
    %v1568 = vpop.f32.mrf.mxu0
    %v1569 = vadd.f32 %v1526, %v1568
    %1570 = vdwg.mxu0
    %1571 = vmatprep.subr.bf16.mxu0 0
    %1572 = vmatpush1.bf16.msra.mxu0 0
    %1573 = vmatprep.subr.bf16.mxu0 0
    %1574 = vmatpush1.bf16.msra.mxu0 0
    %1575 = vmatprep.subr.bf16.mxu0 0
    %1576 = vmatpush1.bf16.msra.mxu0 0
    %1577 = vmatprep.subr.bf16.mxu0 0
    %1578 = vmatpush1.bf16.msra.mxu0 0
    %1579 = vmatprep.subr.bf16.mxu0 0
    %1580 = vmatpush1.bf16.msra.mxu0 0
    %1581 = vmatprep.subr.bf16.mxu0 0
    %1582 = vmatpush1.bf16.msra.mxu0 0
    %1583 = vmatprep.subr.bf16.mxu0 0
    %1584 = vmatpush1.bf16.msra.mxu0 0
    %1585 = vmatprep.subr.bf16.mxu0 %v1069
    %1586 = vmatpush1.bf16.msra.mxu0 %v1068
    %1587 = vmatprep.subr.bf16.mxu0 0
    %1588 = vmatpush2.bf16.msra.mxu0 0
    %1589 = vmatprep.subr.bf16.mxu0 0
    %1590 = vmatpush2.bf16.msra.mxu0 0
    %1591 = vmatprep.subr.bf16.mxu0 0
    %1592 = vmatpush2.bf16.msra.mxu0 0
    %1593 = vmatprep.subr.bf16.mxu0 0
    %1594 = vmatpush2.bf16.msra.mxu0 0
    %1595 = vmatprep.subr.bf16.mxu0 0
    %1596 = vmatpush2.bf16.msra.mxu0 0
    %1597 = vmatprep.subr.bf16.mxu0 0
    %1598 = vmatpush2.bf16.msra.mxu0 0
    %1599 = vmatprep.subr.bf16.mxu0 0
    %1600 = vmatpush2.bf16.msra.mxu0 0
    %1601 = vmatprep.subr.bf16.mxu0 0
    %1602 = vmatpush2.bf16.msra.mxu0 0
    %1603 = vmatprep.mubr.bf16.mxu0 0
    %1604 = vmatmul.mubr.bf16.gmra.mxu0 %v1268
    %v1605 = vpop.f32.mrf.mxu0
    %v1606 = vadd.f32 %v1563, %v1605
    %v1607 = vpop.f32.mrf.mxu0
    %v1608 = vadd.f32 %v1565, %v1607
    %v1609 = vpop.f32.mrf.mxu0
    %v1610 = vadd.f32 %v1567, %v1609
    %v1611 = vpop.f32.mrf.mxu0
    %v1612 = vadd.f32 %v1569, %v1611
    %1613 = vdwg.mxu0
    %v1614 = vmax.f32 %v1434, 0.0
    %v1615 = vmax.f32 %v1436, 0.0
    %v1616 = vmax.f32 %v1606, 0.0
    %v1617 = vmax.f32 %v1608, 0.0
    %v1618 = vmax.f32 %v1438, 0.0
    %v1619 = vmax.f32 %v1440, 0.0
    %v1620 = vmax.f32 %v1610, 0.0
    %v1621 = vmax.f32 %v1612, 0.0
    %v1622 = vpack.c.bf16 %v1618, %v1614
    %v1623 = vpack.c.bf16 %v1619, %v1615
    %v1624 = vpack.c.bf16 %v1620, %v1616
    %v1625 = vpack.c.bf16 %v1621, %v1617
    %v1626 = vld [vmem:[%s3] sm:$0xff]
    %v1627 = vld [vmem:[%s3 + $0x8] sm:$0xff]
    %v1628 = vld [vmem:[%s3 + $0x10] sm:$0xff]
    %v1629 = vld [vmem:[%s3 + $0x18] sm:$0xff]
    %v1630 = vld [vmem:[%s3 + $0x20] sm:$0xff]
    %v1631 = vld [vmem:[%s3 + $0x28] sm:$0xff]
    %v1632 = vld [vmem:[%s3 + $0x30] sm:$0xff]
    %v1633 = vld [vmem:[%s3 + $0x38] sm:$0xff]
    %v1634 = vld [vmem:[%s3 + $0x40] sm:$0xff]
    %v1635 = vld [vmem:[%s3 + $0x48] sm:$0xff]
    %v1636 = vld [vmem:[%s3 + $0x50] sm:$0xff]
    %v1637 = vld [vmem:[%s3 + $0x58] sm:$0xff]
    %v1638 = vld [vmem:[%s3 + $0x60] sm:$0xff]
    %v1639 = vld [vmem:[%s3 + $0x68] sm:$0xff]
    %v1640 = vld [vmem:[%s3 + $0x70] sm:$0xff]
    %v1641 = vld [vmem:[%s3 + $0x78] sm:$0xff]
    %v1642 = vld [vmem:[%s3 + $0x80] sm:$0xff]
    %v1643 = vld [vmem:[%s3 + $0x88] sm:$0xff]
    %v1644 = vld [vmem:[%s3 + $0x90] sm:$0xff]
    %v1645 = vld [vmem:[%s3 + $0x98] sm:$0xff]
    %v1646 = vld [vmem:[%s3 + $0xa0] sm:$0xff]
    %v1647 = vld [vmem:[%s3 + $0xa8] sm:$0xff]
    %v1648 = vld [vmem:[%s3 + $0xb0] sm:$0xff]
    %v1649 = vld [vmem:[%s3 + $0xb8] sm:$0xff]
    %v1650 = vld [vmem:[%s3 + $0xc0] sm:$0xff]
    %v1651 = vld [vmem:[%s3 + $0xc8] sm:$0xff]
    %v1652 = vld [vmem:[%s3 + $0xd0] sm:$0xff]
    %v1653 = vld [vmem:[%s3 + $0xd8] sm:$0xff]
    %v1654 = vld [vmem:[%s3 + $0xe0] sm:$0xff]
    %v1655 = vld [vmem:[%s3 + $0xe8] sm:$0xff]
    %v1656 = vld [vmem:[%s3 + $0xf0] sm:$0xff]
    %v1657 = vld [vmem:[%s3 + $0xf8] sm:$0xff]
    %v1658 = vld [vmem:[%s3 + $0x100] sm:$0xff]
    %v1659 = vld [vmem:[%s3 + $0x108] sm:$0xff]
    %v1660 = vld [vmem:[%s3 + $0x110] sm:$0xff]
    %v1661 = vld [vmem:[%s3 + $0x118] sm:$0xff]
    %v1662 = vld [vmem:[%s3 + $0x120] sm:$0xff]
    %v1663 = vld [vmem:[%s3 + $0x128] sm:$0xff]
    %v1664 = vld [vmem:[%s3 + $0x130] sm:$0xff]
    %v1665 = vld [vmem:[%s3 + $0x138] sm:$0xff]
    %v1666 = vld [vmem:[%s3 + $0x140] sm:$0xff]
    %v1667 = vld [vmem:[%s3 + $0x148] sm:$0xff]
    %v1668 = vld [vmem:[%s3 + $0x150] sm:$0xff]
    %v1669 = vld [vmem:[%s3 + $0x158] sm:$0xff]
    %v1670 = vld [vmem:[%s3 + $0x160] sm:$0xff]
    %v1671 = vld [vmem:[%s3 + $0x168] sm:$0xff]
    %v1672 = vld [vmem:[%s3 + $0x170] sm:$0xff]
    %v1673 = vld [vmem:[%s3 + $0x178] sm:$0xff]
    %v1674 = vld [vmem:[%s3 + $0x180] sm:$0xff]
    %v1675 = vld [vmem:[%s3 + $0x188] sm:$0xff]
    %v1676 = vld [vmem:[%s3 + $0x190] sm:$0xff]
    %v1677 = vld [vmem:[%s3 + $0x198] sm:$0xff]
    %v1678 = vld [vmem:[%s3 + $0x1a0] sm:$0xff]
    %v1679 = vld [vmem:[%s3 + $0x1a8] sm:$0xff]
    %v1680 = vld [vmem:[%s3 + $0x1b0] sm:$0xff]
    %v1681 = vld [vmem:[%s3 + $0x1b8] sm:$0xff]
    %v1682 = vld [vmem:[%s3 + $0x1c0] sm:$0xff]
    %v1683 = vld [vmem:[%s3 + $0x1c8] sm:$0xff]
    %v1684 = vld [vmem:[%s3 + $0x1d0] sm:$0xff]
    %v1685 = vld [vmem:[%s3 + $0x1d8] sm:$0xff]
    %v1686 = vld [vmem:[%s3 + $0x1e0] sm:$0xff]
    %v1687 = vld [vmem:[%s3 + $0x1e8] sm:$0xff]
    %v1688 = vld [vmem:[%s3 + $0x1f0] sm:$0xff]
    %v1689 = vld [vmem:[%s3 + $0x1f8] sm:$0xff]
    %v1690 = vld [vmem:[%s4] sm:$0x3]
    %v1692 = vlaneseq
    %v1693 = vshrl.u32 %v1692, 7
    %v1694 = vsub.s32 0, %v1693
    %v1695 = vrot.slane %v1690, %v1694
    %v1696 = vlaneseq
    %v1697 = vshrl.u32 %v1696, 7
    %v1698 = vsub.s32 1, %v1697
    %v1699 = vrot.slane %v1690, %v1698
    %v1766 = vunpack.c.l.b16 %v1626
    %v1767 = vunpack.c.h.b16 %v1626
    %v1768 = vunpack.c.l.b16 %v1627
    %v1769 = vunpack.c.h.b16 %v1627
    %v1770 = vunpack.c.l.b16 %v1628
    %v1771 = vunpack.c.h.b16 %v1628
    %v1772 = vunpack.c.l.b16 %v1629
    %v1773 = vunpack.c.h.b16 %v1629
    %v1774 = vunpack.c.l.b16 %v1630
    %v1775 = vunpack.c.h.b16 %v1630
    %v1776 = vunpack.c.l.b16 %v1631
    %v1777 = vunpack.c.h.b16 %v1631
    %v1778 = vunpack.c.l.b16 %v1632
    %v1779 = vunpack.c.h.b16 %v1632
    %v1780 = vunpack.c.l.b16 %v1633
    %v1781 = vunpack.c.h.b16 %v1633
    %v1782 = vunpack.c.l.b16 %v1634
    %v1783 = vunpack.c.h.b16 %v1634
    %v1784 = vunpack.c.l.b16 %v1635
    %v1785 = vunpack.c.h.b16 %v1635
    %v1786 = vunpack.c.l.b16 %v1636
    %v1787 = vunpack.c.h.b16 %v1636
    %v1788 = vunpack.c.l.b16 %v1637
    %v1789 = vunpack.c.h.b16 %v1637
    %v1790 = vunpack.c.l.b16 %v1638
    %v1791 = vunpack.c.h.b16 %v1638
    %v1792 = vunpack.c.l.b16 %v1639
    %v1793 = vunpack.c.h.b16 %v1639
    %v1794 = vunpack.c.l.b16 %v1640
    %v1795 = vunpack.c.h.b16 %v1640
    %v1796 = vunpack.c.l.b16 %v1641
    %v1797 = vunpack.c.h.b16 %v1641
    %v1798 = vunpack.c.l.b16 %v1642
    %v1799 = vunpack.c.h.b16 %v1642
    %v1800 = vunpack.c.l.b16 %v1643
    %v1801 = vunpack.c.h.b16 %v1643
    %v1802 = vunpack.c.l.b16 %v1644
    %v1803 = vunpack.c.h.b16 %v1644
    %v1804 = vunpack.c.l.b16 %v1645
    %v1805 = vunpack.c.h.b16 %v1645
    %v1806 = vunpack.c.l.b16 %v1646
    %v1807 = vunpack.c.h.b16 %v1646
    %v1808 = vunpack.c.l.b16 %v1647
    %v1809 = vunpack.c.h.b16 %v1647
    %v1810 = vunpack.c.l.b16 %v1648
    %v1811 = vunpack.c.h.b16 %v1648
    %v1812 = vunpack.c.l.b16 %v1649
    %v1813 = vunpack.c.h.b16 %v1649
    %v1814 = vunpack.c.l.b16 %v1650
    %v1815 = vunpack.c.h.b16 %v1650
    %v1816 = vunpack.c.l.b16 %v1651
    %v1817 = vunpack.c.h.b16 %v1651
    %v1818 = vunpack.c.l.b16 %v1652
    %v1819 = vunpack.c.h.b16 %v1652
    %v1820 = vunpack.c.l.b16 %v1653
    %v1821 = vunpack.c.h.b16 %v1653
    %v1822 = vunpack.c.l.b16 %v1654
    %v1823 = vunpack.c.h.b16 %v1654
    %v1824 = vunpack.c.l.b16 %v1655
    %v1825 = vunpack.c.h.b16 %v1655
    %v1826 = vunpack.c.l.b16 %v1656
    %v1827 = vunpack.c.h.b16 %v1656
    %v1828 = vunpack.c.l.b16 %v1657
    %v1829 = vunpack.c.h.b16 %v1657
    %v1830 = vunpack.c.l.b16 %v1658
    %v1831 = vunpack.c.h.b16 %v1658
    %v1832 = vunpack.c.l.b16 %v1659
    %v1833 = vunpack.c.h.b16 %v1659
    %v1834 = vunpack.c.l.b16 %v1660
    %v1835 = vunpack.c.h.b16 %v1660
    %v1836 = vunpack.c.l.b16 %v1661
    %v1837 = vunpack.c.h.b16 %v1661
    %v1838 = vunpack.c.l.b16 %v1662
    %v1839 = vunpack.c.h.b16 %v1662
    %v1840 = vunpack.c.l.b16 %v1663
    %v1841 = vunpack.c.h.b16 %v1663
    %v1842 = vunpack.c.l.b16 %v1664
    %v1843 = vunpack.c.h.b16 %v1664
    %v1844 = vunpack.c.l.b16 %v1665
    %v1845 = vunpack.c.h.b16 %v1665
    %v1846 = vunpack.c.l.b16 %v1666
    %v1847 = vunpack.c.h.b16 %v1666
    %v1848 = vunpack.c.l.b16 %v1667
    %v1849 = vunpack.c.h.b16 %v1667
    %v1850 = vunpack.c.l.b16 %v1668
    %v1851 = vunpack.c.h.b16 %v1668
    %v1852 = vunpack.c.l.b16 %v1669
    %v1853 = vunpack.c.h.b16 %v1669
    %v1854 = vunpack.c.l.b16 %v1670
    %v1855 = vunpack.c.h.b16 %v1670
    %v1856 = vunpack.c.l.b16 %v1671
    %v1857 = vunpack.c.h.b16 %v1671
    %v1858 = vunpack.c.l.b16 %v1672
    %v1859 = vunpack.c.h.b16 %v1672
    %v1860 = vunpack.c.l.b16 %v1673
    %v1861 = vunpack.c.h.b16 %v1673
    %v1862 = vunpack.c.l.b16 %v1674
    %v1863 = vunpack.c.h.b16 %v1674
    %v1864 = vunpack.c.l.b16 %v1675
    %v1865 = vunpack.c.h.b16 %v1675
    %v1866 = vunpack.c.l.b16 %v1676
    %v1867 = vunpack.c.h.b16 %v1676
    %v1868 = vunpack.c.l.b16 %v1677
    %v1869 = vunpack.c.h.b16 %v1677
    %v1870 = vunpack.c.l.b16 %v1678
    %v1871 = vunpack.c.h.b16 %v1678
    %v1872 = vunpack.c.l.b16 %v1679
    %v1873 = vunpack.c.h.b16 %v1679
    %v1874 = vunpack.c.l.b16 %v1680
    %v1875 = vunpack.c.h.b16 %v1680
    %v1876 = vunpack.c.l.b16 %v1681
    %v1877 = vunpack.c.h.b16 %v1681
    %v1878 = vunpack.c.l.b16 %v1682
    %v1879 = vunpack.c.h.b16 %v1682
    %v1880 = vunpack.c.l.b16 %v1683
    %v1881 = vunpack.c.h.b16 %v1683
    %v1882 = vunpack.c.l.b16 %v1684
    %v1883 = vunpack.c.h.b16 %v1684
    %v1884 = vunpack.c.l.b16 %v1685
    %v1885 = vunpack.c.h.b16 %v1685
    %v1886 = vunpack.c.l.b16 %v1686
    %v1887 = vunpack.c.h.b16 %v1686
    %v1888 = vunpack.c.l.b16 %v1687
    %v1889 = vunpack.c.h.b16 %v1687
    %v1890 = vunpack.c.l.b16 %v1688
    %v1891 = vunpack.c.h.b16 %v1688
    %v1892 = vunpack.c.l.b16 %v1689
    %v1893 = vunpack.c.h.b16 %v1689
    %v1894 = vpack.c.b16 %v1768, %v1766
    %v1895 = vpack.c.b16 %v1769, %v1767
    %v1896 = vpack.c.b16 %v1772, %v1770
    %v1897 = vpack.c.b16 %v1773, %v1771
    %v1898 = vpack.c.b16 %v1776, %v1774
    %v1899 = vpack.c.b16 %v1777, %v1775
    %v1900 = vpack.c.b16 %v1780, %v1778
    %v1901 = vpack.c.b16 %v1781, %v1779
    %v1902 = vpack.c.b16 %v1784, %v1782
    %v1903 = vpack.c.b16 %v1785, %v1783
    %v1904 = vpack.c.b16 %v1788, %v1786
    %v1905 = vpack.c.b16 %v1789, %v1787
    %v1906 = vpack.c.b16 %v1792, %v1790
    %v1907 = vpack.c.b16 %v1793, %v1791
    %v1908 = vpack.c.b16 %v1796, %v1794
    %v1909 = vpack.c.b16 %v1797, %v1795
    %v1910 = vpack.c.b16 %v1800, %v1798
    %v1911 = vpack.c.b16 %v1801, %v1799
    %v1912 = vpack.c.b16 %v1804, %v1802
    %v1913 = vpack.c.b16 %v1805, %v1803
    %v1914 = vpack.c.b16 %v1808, %v1806
    %v1915 = vpack.c.b16 %v1809, %v1807
    %v1916 = vpack.c.b16 %v1812, %v1810
    %v1917 = vpack.c.b16 %v1813, %v1811
    %v1918 = vpack.c.b16 %v1816, %v1814
    %v1919 = vpack.c.b16 %v1817, %v1815
    %v1920 = vpack.c.b16 %v1820, %v1818
    %v1921 = vpack.c.b16 %v1821, %v1819
    %v1922 = vpack.c.b16 %v1824, %v1822
    %v1923 = vpack.c.b16 %v1825, %v1823
    %v1924 = vpack.c.b16 %v1828, %v1826
    %v1925 = vpack.c.b16 %v1829, %v1827
    %v1926 = vpack.c.b16 %v1832, %v1830
    %v1927 = vpack.c.b16 %v1833, %v1831
    %v1928 = vpack.c.b16 %v1836, %v1834
    %v1929 = vpack.c.b16 %v1837, %v1835
    %v1930 = vpack.c.b16 %v1840, %v1838
    %v1931 = vpack.c.b16 %v1841, %v1839
    %v1932 = vpack.c.b16 %v1844, %v1842
    %v1933 = vpack.c.b16 %v1845, %v1843
    %v1934 = vpack.c.b16 %v1848, %v1846
    %v1935 = vpack.c.b16 %v1849, %v1847
    %v1936 = vpack.c.b16 %v1852, %v1850
    %v1937 = vpack.c.b16 %v1853, %v1851
    %v1938 = vpack.c.b16 %v1856, %v1854
    %v1939 = vpack.c.b16 %v1857, %v1855
    %v1940 = vpack.c.b16 %v1860, %v1858
    %v1941 = vpack.c.b16 %v1861, %v1859
    %v1942 = vpack.c.b16 %v1864, %v1862
    %v1943 = vpack.c.b16 %v1865, %v1863
    %v1944 = vpack.c.b16 %v1868, %v1866
    %v1945 = vpack.c.b16 %v1869, %v1867
    %v1946 = vpack.c.b16 %v1872, %v1870
    %v1947 = vpack.c.b16 %v1873, %v1871
    %v1948 = vpack.c.b16 %v1876, %v1874
    %v1949 = vpack.c.b16 %v1877, %v1875
    %v1950 = vpack.c.b16 %v1880, %v1878
    %v1951 = vpack.c.b16 %v1881, %v1879
    %v1952 = vpack.c.b16 %v1884, %v1882
    %v1953 = vpack.c.b16 %v1885, %v1883
    %v1954 = vpack.c.b16 %v1888, %v1886
    %v1955 = vpack.c.b16 %v1889, %v1887
    %v1956 = vpack.c.b16 %v1892, %v1890
    %v1957 = vpack.c.b16 %v1893, %v1891
    %2022 = vmatprep.subr.bf16.mxu0 %v1909
    %2023 = vmatpush1.bf16.msra.mxu0 %v1908
    %2024 = vmatprep.subr.bf16.mxu0 %v1907
    %2025 = vmatpush1.bf16.msra.mxu0 %v1906
    %2026 = vmatprep.subr.bf16.mxu0 %v1905
    %2027 = vmatpush1.bf16.msra.mxu0 %v1904
    %2028 = vmatprep.subr.bf16.mxu0 %v1903
    %2029 = vmatpush1.bf16.msra.mxu0 %v1902
    %2030 = vmatprep.subr.bf16.mxu0 %v1901
    %2031 = vmatpush1.bf16.msra.mxu0 %v1900
    %2032 = vmatprep.subr.bf16.mxu0 %v1899
    %2033 = vmatpush1.bf16.msra.mxu0 %v1898
    %2034 = vmatprep.subr.bf16.mxu0 %v1897
    %2035 = vmatpush1.bf16.msra.mxu0 %v1896
    %2036 = vmatprep.subr.bf16.mxu0 %v1895
    %2037 = vmatpush1.bf16.msra.mxu0 %v1894
    %2038 = vmatprep.subr.bf16.mxu0 %v1925
    %2039 = vmatpush2.bf16.msra.mxu0 %v1924
    %2040 = vmatprep.subr.bf16.mxu0 %v1923
    %2041 = vmatpush2.bf16.msra.mxu0 %v1922
    %2042 = vmatprep.subr.bf16.mxu0 %v1921
    %2043 = vmatpush2.bf16.msra.mxu0 %v1920
    %2044 = vmatprep.subr.bf16.mxu0 %v1919
    %2045 = vmatpush2.bf16.msra.mxu0 %v1918
    %2046 = vmatprep.subr.bf16.mxu0 %v1917
    %2047 = vmatpush2.bf16.msra.mxu0 %v1916
    %2048 = vmatprep.subr.bf16.mxu0 %v1915
    %2049 = vmatpush2.bf16.msra.mxu0 %v1914
    %2050 = vmatprep.subr.bf16.mxu0 %v1913
    %2051 = vmatpush2.bf16.msra.mxu0 %v1912
    %2052 = vmatprep.subr.bf16.mxu0 %v1911
    %2053 = vmatpush2.bf16.msra.mxu0 %v1910
    %2054 = vmatprep.mubr.bf16.mxu0 %v1623
    %2055 = vmatmul.mubr.bf16.gmra.mxu0 %v1622
    %v2056 = vpop.f32.mrf.mxu0
    %v2057 = vadd.f32 %v1695, %v2056
    %v2058 = vpop.f32.mrf.mxu0
    %v2059 = vadd.f32 %v1699, %v2058
    %v2060 = vpop.f32.mrf.mxu0
    %v2061 = vadd.f32 %v1695, %v2060
    %v2062 = vpop.f32.mrf.mxu0
    %v2063 = vadd.f32 %v1699, %v2062
    %2064 = vdwg.mxu0
    %2065 = vmatprep.subr.bf16.mxu0 %v1941
    %2066 = vmatpush1.bf16.msra.mxu0 %v1940
    %2067 = vmatprep.subr.bf16.mxu0 %v1939
    %2068 = vmatpush1.bf16.msra.mxu0 %v1938
    %2069 = vmatprep.subr.bf16.mxu0 %v1937
    %2070 = vmatpush1.bf16.msra.mxu0 %v1936
    %2071 = vmatprep.subr.bf16.mxu0 %v1935
    %2072 = vmatpush1.bf16.msra.mxu0 %v1934
    %2073 = vmatprep.subr.bf16.mxu0 %v1933
    %2074 = vmatpush1.bf16.msra.mxu0 %v1932
    %2075 = vmatprep.subr.bf16.mxu0 %v1931
    %2076 = vmatpush1.bf16.msra.mxu0 %v1930
    %2077 = vmatprep.subr.bf16.mxu0 %v1929
    %2078 = vmatpush1.bf16.msra.mxu0 %v1928
    %2079 = vmatprep.subr.bf16.mxu0 %v1927
    %2080 = vmatpush1.bf16.msra.mxu0 %v1926
    %2081 = vmatprep.subr.bf16.mxu0 %v1957
    %2082 = vmatpush2.bf16.msra.mxu0 %v1956
    %2083 = vmatprep.subr.bf16.mxu0 %v1955
    %2084 = vmatpush2.bf16.msra.mxu0 %v1954
    %2085 = vmatprep.subr.bf16.mxu0 %v1953
    %2086 = vmatpush2.bf16.msra.mxu0 %v1952
    %2087 = vmatprep.subr.bf16.mxu0 %v1951
    %2088 = vmatpush2.bf16.msra.mxu0 %v1950
    %2089 = vmatprep.subr.bf16.mxu0 %v1949
    %2090 = vmatpush2.bf16.msra.mxu0 %v1948
    %2091 = vmatprep.subr.bf16.mxu0 %v1947
    %2092 = vmatpush2.bf16.msra.mxu0 %v1946
    %2093 = vmatprep.subr.bf16.mxu0 %v1945
    %2094 = vmatpush2.bf16.msra.mxu0 %v1944
    %2095 = vmatprep.subr.bf16.mxu0 %v1943
    %2096 = vmatpush2.bf16.msra.mxu0 %v1942
    %2097 = vmatprep.mubr.bf16.mxu0 %v1625
    %2098 = vmatmul.mubr.bf16.gmra.mxu0 %v1624
    %v2099 = vpop.f32.mrf.mxu0
    %v2100 = vadd.f32 %v2057, %v2099
    %v2101 = vpop.f32.mrf.mxu0
    %v2102 = vadd.f32 %v2059, %v2101
    %v2103 = vpop.f32.mrf.mxu0
    %v2104 = vadd.f32 %v2061, %v2103
    %v2105 = vpop.f32.mrf.mxu0
    %v2106 = vadd.f32 %v2063, %v2105
    %2107 = vdwg.mxu0
    %v2108 = vmax.f32 %v2100, 0.0
    %v2109 = vmax.f32 %v2102, 0.0
    %v2110 = vmax.f32 %v2104, 0.0
    %v2111 = vmax.f32 %v2106, 0.0
    %v2112 = vpack.c.bf16 %v2110, %v2108
    %v2113 = vpack.c.bf16 %v2111, %v2109
    %v2114 = vld [vmem:[%s5] sm:$0xf]
    %v2115 = vld [vmem:[%s5 + $0x4] sm:$0xf]
    %v2116 = vld [vmem:[%s5 + $0x8] sm:$0xf]
    %v2117 = vld [vmem:[%s5 + $0xc] sm:$0xf]
    %v2118 = vld [vmem:[%s5 + $0x10] sm:$0xf]
    %v2119 = vld [vmem:[%s5 + $0x14] sm:$0xf]
    %v2120 = vld [vmem:[%s5 + $0x18] sm:$0xf]
    %v2121 = vld [vmem:[%s5 + $0x1c] sm:$0xf]
    %v2122 = vld [vmem:[%s5 + $0x20] sm:$0xf]
    %v2123 = vld [vmem:[%s5 + $0x24] sm:$0xf]
    %v2124 = vld [vmem:[%s5 + $0x28] sm:$0xf]
    %v2125 = vld [vmem:[%s5 + $0x2c] sm:$0xf]
    %v2126 = vld [vmem:[%s5 + $0x30] sm:$0xf]
    %v2127 = vld [vmem:[%s5 + $0x34] sm:$0xf]
    %v2128 = vld [vmem:[%s5 + $0x38] sm:$0xf]
    %v2129 = vld [vmem:[%s5 + $0x3c] sm:$0xf]
    %v2130 = vld [vmem:[%s5 + $0x40] sm:$0xf]
    %v2131 = vld [vmem:[%s5 + $0x44] sm:$0xf]
    %v2132 = vld [vmem:[%s5 + $0x48] sm:$0xf]
    %v2133 = vld [vmem:[%s5 + $0x4c] sm:$0xf]
    %v2134 = vld [vmem:[%s5 + $0x50] sm:$0xf]
    %v2135 = vld [vmem:[%s5 + $0x54] sm:$0xf]
    %v2136 = vld [vmem:[%s5 + $0x58] sm:$0xf]
    %v2137 = vld [vmem:[%s5 + $0x5c] sm:$0xf]
    %v2138 = vld [vmem:[%s5 + $0x60] sm:$0xf]
    %v2139 = vld [vmem:[%s5 + $0x64] sm:$0xf]
    %v2140 = vld [vmem:[%s5 + $0x68] sm:$0xf]
    %v2141 = vld [vmem:[%s5 + $0x6c] sm:$0xf]
    %v2142 = vld [vmem:[%s5 + $0x70] sm:$0xf]
    %v2143 = vld [vmem:[%s5 + $0x74] sm:$0xf]
    %v2144 = vld [vmem:[%s5 + $0x78] sm:$0xf]
    %v2145 = vld [vmem:[%s5 + $0x7c] sm:$0xf]
    %v2146 = vld [vmem:[%s6] sm:$0x1]
    %v2148 = vlaneseq
    %v2149 = vshrl.u32 %v2148, 7
    %v2150 = vsub.s32 0, %v2149
    %v2151 = vrot.slane %v2146, %v2150
    %v2185 = vunpack.c.l.b16 %v2114
    %v2186 = vunpack.c.l.b16 %v2115
    %v2187 = vunpack.c.l.b16 %v2116
    %v2188 = vunpack.c.l.b16 %v2117
    %v2189 = vunpack.c.l.b16 %v2118
    %v2190 = vunpack.c.l.b16 %v2119
    %v2191 = vunpack.c.l.b16 %v2120
    %v2192 = vunpack.c.l.b16 %v2121
    %v2193 = vunpack.c.l.b16 %v2122
    %v2194 = vunpack.c.l.b16 %v2123
    %v2195 = vunpack.c.l.b16 %v2124
    %v2196 = vunpack.c.l.b16 %v2125
    %v2197 = vunpack.c.l.b16 %v2126
    %v2198 = vunpack.c.l.b16 %v2127
    %v2199 = vunpack.c.l.b16 %v2128
    %v2200 = vunpack.c.l.b16 %v2129
    %v2201 = vunpack.c.l.b16 %v2130
    %v2202 = vunpack.c.l.b16 %v2131
    %v2203 = vunpack.c.l.b16 %v2132
    %v2204 = vunpack.c.l.b16 %v2133
    %v2205 = vunpack.c.l.b16 %v2134
    %v2206 = vunpack.c.l.b16 %v2135
    %v2207 = vunpack.c.l.b16 %v2136
    %v2208 = vunpack.c.l.b16 %v2137
    %v2209 = vunpack.c.l.b16 %v2138
    %v2210 = vunpack.c.l.b16 %v2139
    %v2211 = vunpack.c.l.b16 %v2140
    %v2212 = vunpack.c.l.b16 %v2141
    %v2213 = vunpack.c.l.b16 %v2142
    %v2214 = vunpack.c.l.b16 %v2143
    %v2215 = vunpack.c.l.b16 %v2144
    %v2216 = vunpack.c.l.b16 %v2145
    %v2217 = vpack.c.b16 %v2186, %v2185
    %v2218 = vpack.c.b16 %v2188, %v2187
    %v2219 = vpack.c.b16 %v2190, %v2189
    %v2220 = vpack.c.b16 %v2192, %v2191
    %v2221 = vpack.c.b16 %v2194, %v2193
    %v2222 = vpack.c.b16 %v2196, %v2195
    %v2223 = vpack.c.b16 %v2198, %v2197
    %v2224 = vpack.c.b16 %v2200, %v2199
    %v2225 = vpack.c.b16 %v2202, %v2201
    %v2226 = vpack.c.b16 %v2204, %v2203
    %v2227 = vpack.c.b16 %v2206, %v2205
    %v2228 = vpack.c.b16 %v2208, %v2207
    %v2229 = vpack.c.b16 %v2210, %v2209
    %v2230 = vpack.c.b16 %v2212, %v2211
    %v2231 = vpack.c.b16 %v2214, %v2213
    %v2232 = vpack.c.b16 %v2216, %v2215
    %2249 = vmatprep.subr.bf16.mxu0 0
    %2250 = vmatpush1.bf16.msra.mxu0 %v2224
    %2251 = vmatprep.subr.bf16.mxu0 0
    %2252 = vmatpush1.bf16.msra.mxu0 %v2223
    %2253 = vmatprep.subr.bf16.mxu0 0
    %2254 = vmatpush1.bf16.msra.mxu0 %v2222
    %2255 = vmatprep.subr.bf16.mxu0 0
    %2256 = vmatpush1.bf16.msra.mxu0 %v2221
    %2257 = vmatprep.subr.bf16.mxu0 0
    %2258 = vmatpush1.bf16.msra.mxu0 %v2220
    %2259 = vmatprep.subr.bf16.mxu0 0
    %2260 = vmatpush1.bf16.msra.mxu0 %v2219
    %2261 = vmatprep.subr.bf16.mxu0 0
    %2262 = vmatpush1.bf16.msra.mxu0 %v2218
    %2263 = vmatprep.subr.bf16.mxu0 0
    %2264 = vmatpush1.bf16.msra.mxu0 %v2217
    %2265 = vmatprep.subr.bf16.mxu0 0
    %2266 = vmatpush2.bf16.msra.mxu0 %v2232
    %2267 = vmatprep.subr.bf16.mxu0 0
    %2268 = vmatpush2.bf16.msra.mxu0 %v2231
    %2269 = vmatprep.subr.bf16.mxu0 0
    %2270 = vmatpush2.bf16.msra.mxu0 %v2230
    %2271 = vmatprep.subr.bf16.mxu0 0
    %2272 = vmatpush2.bf16.msra.mxu0 %v2229
    %2273 = vmatprep.subr.bf16.mxu0 0
    %2274 = vmatpush2.bf16.msra.mxu0 %v2228
    %2275 = vmatprep.subr.bf16.mxu0 0
    %2276 = vmatpush2.bf16.msra.mxu0 %v2227
    %2277 = vmatprep.subr.bf16.mxu0 0
    %2278 = vmatpush2.bf16.msra.mxu0 %v2226
    %2279 = vmatprep.subr.bf16.mxu0 0
    %2280 = vmatpush2.bf16.msra.mxu0 %v2225
    %2281 = vmatprep.mubr.bf16.mxu0 %v2113
    %2282 = vmatmul.mubr.bf16.gmra.mxu0 %v2112
    %v2283 = vpop.f32.mrf.mxu0
    %v2284 = vadd.f32 %v2151, %v2283
    %v2285 = vpop.f32.mrf.mxu0
    %v2286 = vpop.f32.mrf.mxu0
    %v2287 = vadd.f32 %v2151, %v2286
    %v2288 = vpop.f32.mrf.mxu0
    %2289 = vdwg.mxu0
    %v2290 = vmax.f32 %v2284, 0.0
    %v2291 = vmax.f32 %v2287, 0.0
    %v2292 = vpack.c.bf16 %v2291, %v2290
    %v2293 = vld [vmem:[%s7] sm:$0xf]
    %v2294 = vld [vmem:[%s7 + $0x4] sm:$0xf]
    %v2295 = vld [vmem:[%s7 + $0x8] sm:$0xf]
    %v2296 = vld [vmem:[%s7 + $0xc] sm:$0xf]
    %v2297 = vld [vmem:[%s7 + $0x10] sm:$0xf]
    %v2298 = vld [vmem:[%s7 + $0x14] sm:$0xf]
    %v2299 = vld [vmem:[%s7 + $0x18] sm:$0xf]
    %v2300 = vld [vmem:[%s7 + $0x1c] sm:$0xf]
    %v2301 = vld [vmem:[%s7 + $0x20] sm:$0xf]
    %v2302 = vld [vmem:[%s7 + $0x24] sm:$0xf]
    %v2303 = vld [vmem:[%s7 + $0x28] sm:$0xf]
    %v2304 = vld [vmem:[%s7 + $0x2c] sm:$0xf]
    %v2305 = vld [vmem:[%s7 + $0x30] sm:$0xf]
    %v2306 = vld [vmem:[%s7 + $0x34] sm:$0xf]
    %v2307 = vld [vmem:[%s7 + $0x38] sm:$0xf]
    %v2308 = vld [vmem:[%s7 + $0x3c] sm:$0xf]
    %v2309 = vld [vmem:[%s8] sm:$0x1]
    %v2311 = vlaneseq
    %v2312 = vshrl.u32 %v2311, 7
    %v2313 = vsub.s32 0, %v2312
    %v2314 = vrot.slane %v2309, %v2313
    %v2332 = vunpack.c.l.b16 %v2293
    %v2333 = vunpack.c.l.b16 %v2294
    %v2334 = vunpack.c.l.b16 %v2295
    %v2335 = vunpack.c.l.b16 %v2296
    %v2336 = vunpack.c.l.b16 %v2297
    %v2337 = vunpack.c.l.b16 %v2298
    %v2338 = vunpack.c.l.b16 %v2299
    %v2339 = vunpack.c.l.b16 %v2300
    %v2340 = vunpack.c.l.b16 %v2301
    %v2341 = vunpack.c.l.b16 %v2302
    %v2342 = vunpack.c.l.b16 %v2303
    %v2343 = vunpack.c.l.b16 %v2304
    %v2344 = vunpack.c.l.b16 %v2305
    %v2345 = vunpack.c.l.b16 %v2306
    %v2346 = vunpack.c.l.b16 %v2307
    %v2347 = vunpack.c.l.b16 %v2308
    %v2348 = vpack.c.b16 %v2333, %v2332
    %v2349 = vpack.c.b16 %v2335, %v2334
    %v2350 = vpack.c.b16 %v2337, %v2336
    %v2351 = vpack.c.b16 %v2339, %v2338
    %v2352 = vpack.c.b16 %v2341, %v2340
    %v2353 = vpack.c.b16 %v2343, %v2342
    %v2354 = vpack.c.b16 %v2345, %v2344
    %v2355 = vpack.c.b16 %v2347, %v2346
    %2364 = vmatprep.subr.bf16.mxu0 0
    %2365 = vmatpush1.bf16.msra.mxu0 %v2355
    %2366 = vmatprep.subr.bf16.mxu0 0
    %2367 = vmatpush1.bf16.msra.mxu0 %v2354
    %2368 = vmatprep.subr.bf16.mxu0 0
    %2369 = vmatpush1.bf16.msra.mxu0 %v2353
    %2370 = vmatprep.subr.bf16.mxu0 0
    %2371 = vmatpush1.bf16.msra.mxu0 %v2352
    %2372 = vmatprep.subr.bf16.mxu0 0
    %2373 = vmatpush1.bf16.msra.mxu0 %v2351
    %2374 = vmatprep.subr.bf16.mxu0 0
    %2375 = vmatpush1.bf16.msra.mxu0 %v2350
    %2376 = vmatprep.subr.bf16.mxu0 0
    %2377 = vmatpush1.bf16.msra.mxu0 %v2349
    %2378 = vmatprep.subr.bf16.mxu0 0
    %2379 = vmatpush1.bf16.msra.mxu0 %v2348
    %2380 = vmatprep.subr.bf16.mxu0 0
    %2381 = vmatpush2.bf16.msra.mxu0 0
    %2382 = vmatprep.subr.bf16.mxu0 0
    %2383 = vmatpush2.bf16.msra.mxu0 0
    %2384 = vmatprep.subr.bf16.mxu0 0
    %2385 = vmatpush2.bf16.msra.mxu0 0
    %2386 = vmatprep.subr.bf16.mxu0 0
    %2387 = vmatpush2.bf16.msra.mxu0 0
    %2388 = vmatprep.subr.bf16.mxu0 0
    %2389 = vmatpush2.bf16.msra.mxu0 0
    %2390 = vmatprep.subr.bf16.mxu0 0
    %2391 = vmatpush2.bf16.msra.mxu0 0
    %2392 = vmatprep.subr.bf16.mxu0 0
    %2393 = vmatpush2.bf16.msra.mxu0 0
    %2394 = vmatprep.subr.bf16.mxu0 0
    %2395 = vmatpush2.bf16.msra.mxu0 0
    %2396 = vmatprep.mubr.bf16.mxu0 0
    %2397 = vmatmul.mubr.bf16.gmra.mxu0 %v2292
    %v2398 = vpop.f32.mrf.mxu0
    %v2399 = vadd.f32 %v2314, %v2398
    %v2400 = vpop.f32.mrf.mxu0
    %v2401 = vpop.f32.mrf.mxu0
    %v2402 = vadd.f32 %v2314, %v2401
    %v2403 = vpop.f32.mrf.mxu0
    %2404 = vdwg.mxu0
    %2405 = vst [vmem:[%s9] sm:$0xff] %v2399
    %2406 = vst [vmem:[%s9 + $0x8] sm:$0xff] %v2402
    // Predicated region
    $region42: #{deep_nn_forward.1} parent=1 // pred_check
      _
    $region43: #{deep_nn_forward.1} parent=1 // pred_check_branch
      %2408 = sbr.rel (0) target = $region45
    $region44: #{deep_nn_forward.1} parent=1 // pred_region
      _
    $region45: #{deep_nn_forward.1} parent=1 // pred_fallthru
      _
    // Predicated region
    $region46: #{deep_nn_forward.1} parent=1 // pred_check
      _
    $region47: #{deep_nn_forward.1} parent=1 // pred_check_branch
      %2410 = sbr.rel (0) target = $region49
    $region48: #{deep_nn_forward.1} parent=1 // pred_region
      _
    $region49: #{deep_nn_forward.1} parent=1 // pred_fallthru
      _
    %2411 = vsyncpa [#allocation3], 1

</llo_original>
